<compile_context>
chip_gen: v7x
topology: tpu7x:2x2x1
jax: 0.10.0
libtpu: 0.0.40
codegen_flags: <defaults>
</compile_context>

<pallas_src>
import functools
import math

import jax
import jax.numpy as jnp
from jax.experimental import pallas as pl
from jax.experimental.pallas import tpu as pltpu

HIDDEN = 256
NEG_SLOPE = 0.01      # F.leaky_relu default
LANE = 128            # TPU vreg lane width
TINY_K = 16           # below this, lin1 runs on the VPU (no degenerate-K MXU pass)


def _leaky_relu(x):
    # one vmul + one vmax, cheaper than compare+select
    return jnp.maximum(x, NEG_SLOPE * x)


def _round_up(n, m):
    return (n + m - 1) // m * m


def _choose_batch_tile(B):
    """Batch tile policy: a single tile for small B; otherwise >=2 tiles of
    >=256 rows (fills the 256-wide MXU M extent on v6e/v7x and gives the
    second v7x TensorCore work), capped at 1024 rows to bound VMEM /
    pipeline latency."""
    if B < 512:
        return _round_up(B, 8)
    return min(_round_up(pl.cdiv(B, 2), 256), 1024)


def dqfd_mlp_kernel(x_ref,
                    w1_ref, b1_ref,
                    w2_ref, b2_ref,
                    w3_ref, b3_ref,
                    w4_ref, b4_ref,
                    out_ref, *, tiny_in, tiny_head):
    in_dim = x_ref.shape[1]

    # ---- lin1 (NO activation, per the reference forward) ----
    if tiny_in:
        # in_dim is tiny (e.g. 4): outer-product accumulation on the VPU in
        # f32.  Avoids a degenerate-K MXU pass and any HBM feature padding.
        x = x_ref[...].astype(jnp.float32)
        h1 = b1_ref[...] + x[:, 0:1] * w1_ref[0:1, :]
        for k in range(1, in_dim):
            h1 = h1 + x[:, k:k + 1] * w1_ref[k:k + 1, :]
    else:
        h1 = jnp.dot(x_ref[...].astype(jnp.bfloat16), w1_ref[...],
                     preferred_element_type=jnp.float32) + b1_ref[...]

    # ---- lin2 + leaky_relu (bf16 operands, f32 MXU accumulation) ----
    h2 = _leaky_relu(
        jnp.dot(h1.astype(jnp.bfloat16), w2_ref[...],
                preferred_element_type=jnp.float32) + b2_ref[...])

    # ---- lin3 + leaky_relu ----
    h3 = _leaky_relu(
        jnp.dot(h2.astype(jnp.bfloat16), w3_ref[...],
                preferred_element_type=jnp.float32) + b3_ref[...])

    # ---- lin4 (no activation) ----
    if tiny_head:
        # num_actions == 1: broadcast-multiply + lane reduction (XLU slot),
        # unpadded [tb, 1] output block -> 128x less HBM writeback.
        out = jnp.sum(h3 * w4_ref[...], axis=-1, keepdims=True) + b4_ref[...]
    else:
        out = jnp.dot(h3.astype(jnp.bfloat16), w4_ref[...],
                      preferred_element_type=jnp.float32) + b4_ref[...]
    out_ref[...] = out.astype(out_ref.dtype)


def prepare_params(params):
    """One-time conversion of the logical-shape f32 params into the dtypes /
    layouts the kernel streams (bf16 hidden weights, transposed f32 head for
    num_actions==1).  Call once after init / weight update, NOT per forward."""
    in_dim = params["w1"].shape[0]
    num_actions = params["w4"].shape[1]
    prep = {
        "w1": params["w1"].astype(jnp.float32 if in_dim <= TINY_K else jnp.bfloat16),
        "b1": params["b1"].astype(jnp.float32).reshape(1, HIDDEN),
        "w2": params["w2"].astype(jnp.bfloat16),
        "b2": params["b2"].astype(jnp.float32).reshape(1, HIDDEN),
        "w3": params["w3"].astype(jnp.bfloat16),
        "b3": params["b3"].astype(jnp.float32).reshape(1, HIDDEN),
    }
    if num_actions == 1:
        # tiny head: store transposed, f32 (used on the VPU/XLU, not the MXU)
        prep["w4"] = params["w4"].astype(jnp.float32).T          # (1, HIDDEN)
        prep["b4"] = params["b4"].astype(jnp.float32).reshape(1, 1)
    else:
        out_pad = _round_up(num_actions, LANE)
        prep["w4"] = (jnp.zeros((HIDDEN, out_pad), jnp.bfloat16)
                      .at[:, :num_actions].set(params["w4"].astype(jnp.bfloat16)))
        prep["b4"] = (jnp.zeros((1, out_pad), jnp.float32)
                      .at[:, :num_actions].set(
                          params["b4"].astype(jnp.float32).reshape(1, num_actions)))
    return prep


@functools.partial(jax.jit, static_argnames=("num_actions", "block_b"))
def dqfd_forward(x, prep, *, num_actions=1, block_b=None):
    """x: [B, input_shape] (any float dtype). prep: output of prepare_params().
    Returns [B, num_actions] float32."""
    B, in_dim = x.shape
    tiny_in = in_dim <= TINY_K
    tiny_head = num_actions == 1
    head_cols = num_actions if tiny_head else _round_up(num_actions, LANE)

    tb = _choose_batch_tile(B) if block_b is None else _round_up(min(block_b, B), 8)
    b_pad = _round_up(B, tb)

    xp = x.astype(jnp.float32)
    if b_pad != B:
        # only the ragged batch tail is padded; features stay unpadded
        xp = jnp.zeros((b_pad, in_dim), jnp.float32).at[:B, :].set(xp)

    grid = (b_pad // tb,)

    def _resident(arr):
        # Full-array weight/bias block with a constant index_map -> stays
        # VMEM-resident across all batch tiles (no per-step re-DMA).
        return pl.BlockSpec(arr.shape, lambda i: (0, 0))

    in_specs = [
        pl.BlockSpec((tb, in_dim), lambda i: (i, 0)),   # x tiled over batch
        _resident(prep["w1"]), _resident(prep["b1"]),
        _resident(prep["w2"]), _resident(prep["b2"]),
        _resident(prep["w3"]), _resident(prep["b3"]),
        _resident(prep["w4"]), _resident(prep["b4"]),
    ]
    out_spec = pl.BlockSpec((tb, head_cols), lambda i: (i, 0))

    weight_names = ("w1", "b1", "w2", "b2", "w3", "b3", "w4", "b4")
    weight_bytes = sum(prep[n].size * prep[n].dtype.itemsize for n in weight_names)
    flops = 2 * b_pad * (in_dim * HIDDEN + 2 * HIDDEN * HIDDEN + HIDDEN * head_cols)
    bytes_accessed = (b_pad * in_dim * 4           # x (f32, unpadded features)
                      + b_pad * head_cols * 4      # output (f32)
                      + weight_bytes)

    kernel = functools.partial(dqfd_mlp_kernel, tiny_in=tiny_in, tiny_head=tiny_head)

    out_padded = pl.pallas_call(
        kernel,
        out_shape=jax.ShapeDtypeStruct((b_pad, head_cols), jnp.float32),
        grid=grid,
        in_specs=in_specs,
        out_specs=out_spec,
        compiler_params=pltpu.CompilerParams(
            dimension_semantics=("parallel",),      # batch tiles shard across TCs
            vmem_limit_bytes=32 * 1024 * 1024),
        cost_estimate=pl.CostEstimate(
            flops=flops, transcendentals=0, bytes_accessed=bytes_accessed),
    )(xp, prep["w1"], prep["b1"], prep["w2"], prep["b2"],
      prep["w3"], prep["b3"], prep["w4"], prep["b4"])

    return out_padded[:B, :num_actions]


def init_params(key, input_shape=4, num_actions=1, dtype=jnp.float32):
    """Deterministic init mimicking torch.nn.Linear default:
    U(-1/sqrt(fan_in), 1/sqrt(fan_in)) for weight and bias.
    Weights stored transposed as [in, out]; biases as [1, out]."""
    dims = [(input_shape, HIDDEN), (HIDDEN, HIDDEN),
            (HIDDEN, HIDDEN), (HIDDEN, num_actions)]
    params = {}
    for i, (fan_in, fan_out) in enumerate(dims, start=1):
        key, kw, kb = jax.random.split(key, 3)
        bound = 1.0 / math.sqrt(fan_in)
        params[f"w{i}"] = jax.random.uniform(kw, (fan_in, fan_out), dtype,
                                             minval=-bound, maxval=bound)
        params[f"b{i}"] = jax.random.uniform(kb, (1, fan_out), dtype,
                                             minval=-bound, maxval=bound)
    return params


def reference_forward(x, params):
    """Pure-JAX reference matching the kernel's numerics (bf16 hidden matmuls
    with f32 accumulation; f32 first/last layers for tiny in_dim / head).
    NOTE: bf16 hidden weights => not bit-identical to a pure-f32 PyTorch
    forward (~1e-3 relative error); keep f32 weights end to end if exact
    Q-value parity with the torch model is required."""
    in_dim = params["w1"].shape[0]
    num_actions = params["w4"].shape[1]

    def mm_bf16(a, w):
        return jax.lax.dot(a.astype(jnp.bfloat16), w.astype(jnp.bfloat16),
                           preferred_element_type=jnp.float32)

    x32 = x.astype(jnp.float32)
    if in_dim <= TINY_K:
        h1 = x32 @ params["w1"].astype(jnp.float32) + params["b1"]
    else:
        h1 = mm_bf16(x32, params["w1"]) + params["b1"]
    h2 = _leaky_relu(mm_bf16(h1, params["w2"]) + params["b2"])
    h3 = _leaky_relu(mm_bf16(h2, params["w3"]) + params["b3"])
    if num_actions == 1:
        return h3 @ params["w4"].astype(jnp.float32) + params["b4"]
    return mm_bf16(h3, params["w4"]) + params["b4"]


if __name__ == "__main__":
    key = jax.random.PRNGKey(0)
    key, kx1, kx2 = jax.random.split(key, 3)

    INPUT_SHAPE, NUM_ACTIONS = 4, 1
    params = init_params(key, INPUT_SHAPE, NUM_ACTIONS, jnp.float32)
    prep = prepare_params(params)        # one-time weight conversion (review #1)

    # Case 1: B=512 -> two 256-row tiles (multi-tile / both-TensorCore path).
    B1 = 512
    x1 = jax.random.normal(kx1, (B1, INPUT_SHAPE), jnp.float32)
    out1 = jax.block_until_ready(dqfd_forward(x1, prep, num_actions=NUM_ACTIONS))
    ref1 = reference_forward(x1, params)
    assert out1.shape == (B1, NUM_ACTIONS), out1.shape
    assert jnp.allclose(out1, ref1, atol=2e-3, rtol=2e-3), "mismatch vs reference (B=512)"

    # Case 2: ragged small batch to exercise batch padding / single-tile path.
    B2 = 5
    x2 = jax.random.normal(kx2, (B2, INPUT_SHAPE), jnp.float32)
    out2 = jax.block_until_ready(dqfd_forward(x2, prep, num_actions=NUM_ACTIONS))
    ref2 = reference_forward(x2, params)
    assert out2.shape == (B2, NUM_ACTIONS), out2.shape
    assert jnp.allclose(out2, ref2, atol=2e-3, rtol=2e-3), "mismatch vs reference (B=5)"

    print("KERNEL_OK")
</pallas_src>

<mosaic_0001>
module attributes {stable_mosaic.version = 11 : i64} {
  func.func @dqfd_mlp_kernel(%arg0: i32, %arg1: memref<256x4xf32, #tpu.memory_space<vmem>>, %arg2: memref<4x256xf32, #tpu.memory_space<vmem>>, %arg3: memref<1x256xf32, #tpu.memory_space<vmem>>, %arg4: memref<256x256xbf16, #tpu.memory_space<vmem>>, %arg5: memref<1x256xf32, #tpu.memory_space<vmem>>, %arg6: memref<256x256xbf16, #tpu.memory_space<vmem>>, %arg7: memref<1x256xf32, #tpu.memory_space<vmem>>, %arg8: memref<1x256xf32, #tpu.memory_space<vmem>>, %arg9: memref<1x1xf32, #tpu.memory_space<vmem>>, %arg10: memref<256x1xf32, #tpu.memory_space<vmem>>) attributes {dimension_semantics = [#tpu.dimension_semantics<parallel>], iteration_bounds = array<i64: 2>, scalar_prefetch = 0 : i64, scratch_operands = 0 : i64, tpu.core_type = #tpu.core_type<tc>, window_params = [{transform_indices = @transform_0, window_bounds = array<i64: 256, 4>}, {pipeline_mode = #tpu.pipeline_mode<synchronous>, transform_indices = @transform_1, window_bounds = array<i64: 4, 256>}, {pipeline_mode = #tpu.pipeline_mode<synchronous>, transform_indices = @transform_2, window_bounds = array<i64: 1, 256>}, {pipeline_mode = #tpu.pipeline_mode<synchronous>, transform_indices = @transform_3, window_bounds = array<i64: 256, 256>}, {pipeline_mode = #tpu.pipeline_mode<synchronous>, transform_indices = @transform_4, window_bounds = array<i64: 1, 256>}, {pipeline_mode = #tpu.pipeline_mode<synchronous>, transform_indices = @transform_5, window_bounds = array<i64: 256, 256>}, {pipeline_mode = #tpu.pipeline_mode<synchronous>, transform_indices = @transform_6, window_bounds = array<i64: 1, 256>}, {pipeline_mode = #tpu.pipeline_mode<synchronous>, transform_indices = @transform_7, window_bounds = array<i64: 1, 256>}, {pipeline_mode = #tpu.pipeline_mode<synchronous>, transform_indices = @transform_8, window_bounds = array<i64: 1, 1>}, {transform_indices = @transform_9, window_bounds = array<i64: 256, 1>}]} {
    %c0 = arith.constant 0 : index
    %c0_0 = arith.constant 0 : index
    %0 = vector.load %arg1[%c0, %c0_0] : memref<256x4xf32, #tpu.memory_space<vmem>>, vector<256x4xf32>
    %c0_1 = arith.constant 0 : index
    %c0_2 = arith.constant 0 : index
    %1 = vector.load %arg3[%c0_1, %c0_2] : memref<1x256xf32, #tpu.memory_space<vmem>>, vector<1x256xf32>
    %2 = vector.extract_strided_slice %0 {offsets = [0, 0], sizes = [256, 1], strides = [1, 1]} : vector<256x4xf32> to vector<256x1xf32>
    %c0_3 = arith.constant 0 : index
    %c0_4 = arith.constant 0 : index
    %3 = vector.load %arg2[%c0_3, %c0_4] : memref<4x256xf32, #tpu.memory_space<vmem>>, vector<1x256xf32>
    %4 = vector.broadcast %2 : vector<256x1xf32> to vector<256x256xf32>
    %5 = vector.broadcast %3 : vector<1x256xf32> to vector<256x256xf32>
    %6 = arith.mulf %4, %5 : vector<256x256xf32>
    %7 = vector.broadcast %1 : vector<1x256xf32> to vector<256x256xf32>
    %8 = arith.addf %7, %6 : vector<256x256xf32>
    %9 = vector.extract_strided_slice %0 {offsets = [0, 1], sizes = [256, 1], strides = [1, 1]} : vector<256x4xf32> to vector<256x1xf32>
    %c1 = arith.constant 1 : index
    %c0_5 = arith.constant 0 : index
    %10 = vector.load %arg2[%c1, %c0_5] : memref<4x256xf32, #tpu.memory_space<vmem>>, vector<1x256xf32>
    %11 = vector.broadcast %9 : vector<256x1xf32> to vector<256x256xf32>
    %12 = vector.broadcast %10 : vector<1x256xf32> to vector<256x256xf32>
    %13 = arith.mulf %11, %12 : vector<256x256xf32>
    %14 = arith.addf %8, %13 : vector<256x256xf32>
    %15 = vector.extract_strided_slice %0 {offsets = [0, 2], sizes = [256, 1], strides = [1, 1]} : vector<256x4xf32> to vector<256x1xf32>
    %c2 = arith.constant 2 : index
    %c0_6 = arith.constant 0 : index
    %16 = vector.load %arg2[%c2, %c0_6] : memref<4x256xf32, #tpu.memory_space<vmem>>, vector<1x256xf32>
    %17 = vector.broadcast %15 : vector<256x1xf32> to vector<256x256xf32>
    %18 = vector.broadcast %16 : vector<1x256xf32> to vector<256x256xf32>
    %19 = arith.mulf %17, %18 : vector<256x256xf32>
    %20 = arith.addf %14, %19 : vector<256x256xf32>
    %21 = vector.extract_strided_slice %0 {offsets = [0, 3], sizes = [256, 1], strides = [1, 1]} : vector<256x4xf32> to vector<256x1xf32>
    %c3 = arith.constant 3 : index
    %c0_7 = arith.constant 0 : index
    %22 = vector.load %arg2[%c3, %c0_7] : memref<4x256xf32, #tpu.memory_space<vmem>>, vector<1x256xf32>
    %23 = vector.broadcast %21 : vector<256x1xf32> to vector<256x256xf32>
    %24 = vector.broadcast %22 : vector<1x256xf32> to vector<256x256xf32>
    %25 = arith.mulf %23, %24 : vector<256x256xf32>
    %26 = arith.addf %20, %25 : vector<256x256xf32>
    %27 = arith.truncf %26 : vector<256x256xf32> to vector<256x256xbf16>
    %c0_8 = arith.constant 0 : index
    %c0_9 = arith.constant 0 : index
    %28 = vector.load %arg4[%c0_8, %c0_9] : memref<256x256xbf16, #tpu.memory_space<vmem>>, vector<256x256xbf16>
    %cst = arith.constant dense<0.000000e+00> : vector<256x256xf32>
    %29 = tpu.matmul %27, %28, %cst {dimension_numbers = #tpu.dot_dimension_numbers<[1], [0], [0], [1], [0, 0, 1, 1], [], []>} : vector<256x256xbf16>, vector<256x256xbf16>, vector<256x256xf32> -> vector<256x256xf32>
    %c0_10 = arith.constant 0 : index
    %c0_11 = arith.constant 0 : index
    %30 = vector.load %arg5[%c0_10, %c0_11] : memref<1x256xf32, #tpu.memory_space<vmem>>, vector<1x256xf32>
    %31 = vector.broadcast %30 : vector<1x256xf32> to vector<256x256xf32>
    %32 = arith.addf %29, %31 : vector<256x256xf32>
    %cst_12 = arith.constant 0.00999999977 : f32
    %33 = vector.broadcast %cst_12 : f32 to vector<256x256xf32>
    %34 = arith.mulf %33, %32 : vector<256x256xf32>
    %35 = arith.maximumf %32, %34 : vector<256x256xf32>
    %36 = arith.truncf %35 : vector<256x256xf32> to vector<256x256xbf16>
    %c0_13 = arith.constant 0 : index
    %c0_14 = arith.constant 0 : index
    %37 = vector.load %arg6[%c0_13, %c0_14] : memref<256x256xbf16, #tpu.memory_space<vmem>>, vector<256x256xbf16>
    %cst_15 = arith.constant dense<0.000000e+00> : vector<256x256xf32>
    %38 = tpu.matmul %36, %37, %cst_15 {dimension_numbers = #tpu.dot_dimension_numbers<[1], [0], [0], [1], [0, 0, 1, 1], [], []>} : vector<256x256xbf16>, vector<256x256xbf16>, vector<256x256xf32> -> vector<256x256xf32>
    %c0_16 = arith.constant 0 : index
    %c0_17 = arith.constant 0 : index
    %39 = vector.load %arg7[%c0_16, %c0_17] : memref<1x256xf32, #tpu.memory_space<vmem>>, vector<1x256xf32>
    %40 = vector.broadcast %39 : vector<1x256xf32> to vector<256x256xf32>
    %41 = arith.addf %38, %40 : vector<256x256xf32>
    %cst_18 = arith.constant 0.00999999977 : f32
    %42 = vector.broadcast %cst_18 : f32 to vector<256x256xf32>
    %43 = arith.mulf %42, %41 : vector<256x256xf32>
    %44 = arith.maximumf %41, %43 : vector<256x256xf32>
    %c0_19 = arith.constant 0 : index
    %c0_20 = arith.constant 0 : index
    %45 = vector.load %arg8[%c0_19, %c0_20] : memref<1x256xf32, #tpu.memory_space<vmem>>, vector<1x256xf32>
    %46 = vector.broadcast %45 : vector<1x256xf32> to vector<256x256xf32>
    %47 = arith.mulf %44, %46 : vector<256x256xf32>
    %cst_21 = arith.constant dense<0.000000e+00> : vector<256xf32>
    %48 = vector.multi_reduction <add>, %47, %cst_21 [1] : vector<256x256xf32> to vector<256xf32>
    %49 = vector.shape_cast %48 : vector<256xf32> to vector<256x1xf32>
    %c0_22 = arith.constant 0 : index
    %c0_23 = arith.constant 0 : index
    %50 = vector.load %arg9[%c0_22, %c0_23] : memref<1x1xf32, #tpu.memory_space<vmem>>, vector<1x1xf32>
    %51 = vector.broadcast %50 : vector<1x1xf32> to vector<256x1xf32>
    %52 = arith.addf %49, %51 : vector<256x1xf32>
    %c0_24 = arith.constant 0 : index
    %c0_25 = arith.constant 0 : index
    %53 = vector.load %arg10[%c0_24, %c0_25] : memref<256x1xf32, #tpu.memory_space<vmem>>, vector<256x1xf32>
    tpu.vector_store %arg10[%c0_24, %c0_25], %52 {strides = array<i32>} : memref<256x1xf32, #tpu.memory_space<vmem>>, vector<256x1xf32>,
    return
  }
  func.func @transform_0(%arg0: i32) -> (i32, i32) {
    %c0_i32 = arith.constant 0 : i32
    %c0_i32_0 = arith.constant 0 : i32
    return %arg0, %c0_i32 : i32, i32
  }
  func.func @transform_1(%arg0: i32) -> (i32, i32) {
    %c0_i32 = arith.constant 0 : i32
    %c0_i32_0 = arith.constant 0 : i32
    %c0_i32_1 = arith.constant 0 : i32
    return %c0_i32, %c0_i32_0 : i32, i32
  }
  func.func @transform_2(%arg0: i32) -> (i32, i32) {
    %c0_i32 = arith.constant 0 : i32
    %c0_i32_0 = arith.constant 0 : i32
    %c0_i32_1 = arith.constant 0 : i32
    return %c0_i32, %c0_i32_0 : i32, i32
  }
  func.func @transform_3(%arg0: i32) -> (i32, i32) {
    %c0_i32 = arith.constant 0 : i32
    %c0_i32_0 = arith.constant 0 : i32
    %c0_i32_1 = arith.constant 0 : i32
    return %c0_i32, %c0_i32_0 : i32, i32
  }
  func.func @transform_4(%arg0: i32) -> (i32, i32) {
    %c0_i32 = arith.constant 0 : i32
    %c0_i32_0 = arith.constant 0 : i32
    %c0_i32_1 = arith.constant 0 : i32
    return %c0_i32, %c0_i32_0 : i32, i32
  }
  func.func @transform_5(%arg0: i32) -> (i32, i32) {
    %c0_i32 = arith.constant 0 : i32
    %c0_i32_0 = arith.constant 0 : i32
    %c0_i32_1 = arith.constant 0 : i32
    return %c0_i32, %c0_i32_0 : i32, i32
  }
  func.func @transform_6(%arg0: i32) -> (i32, i32) {
    %c0_i32 = arith.constant 0 : i32
    %c0_i32_0 = arith.constant 0 : i32
    %c0_i32_1 = arith.constant 0 : i32
    return %c0_i32, %c0_i32_0 : i32, i32
  }
  func.func @transform_7(%arg0: i32) -> (i32, i32) {
    %c0_i32 = arith.constant 0 : i32
    %c0_i32_0 = arith.constant 0 : i32
    %c0_i32_1 = arith.constant 0 : i32
    return %c0_i32, %c0_i32_0 : i32, i32
  }
  func.func @transform_8(%arg0: i32) -> (i32, i32) {
    %c0_i32 = arith.constant 0 : i32
    %c0_i32_0 = arith.constant 0 : i32
    %c0_i32_1 = arith.constant 0 : i32
    return %c0_i32, %c0_i32_0 : i32, i32
  }
  func.func @transform_9(%arg0: i32) -> (i32, i32) {
    %c0_i32 = arith.constant 0 : i32
    %c0_i32_0 = arith.constant 0 : i32
    return %arg0, %c0_i32 : i32, i32
  }
}

</mosaic_0001>

<llo_original>
// kernel: dqfd_forward.1
$region0: #{dqfd_forward.1}
  #allocation0 [shape = 'u32[]', space=smem, size = 0x4, offset = 0x4, fixed_abs, tag = 'smem constant byte address 0x4 - core index']
  #allocation1 [shape = 'u32[144,128]{1,0:T(1,128)}', space=vmem, size = 0x12000, scoped, tag = 'internal scratch']
  #allocation2 [shape = 'f32[1,1]{1,0:T(1,128)S(1)}', space=vmem, size = 0x200, scoped, tag = 'scoped memory for dqfd_forward.1']
  %s0 = inlined_call_operand.vmem [shape: f32[512,4], index: 0, kind: input, shape index: {}]
  %s1 = inlined_call_operand.vmem [shape: f32[4,256], index: 1, kind: input, shape index: {}]
  %s2 = inlined_call_operand.vmem [shape: f32[1,256], index: 2, kind: input, shape index: {}]
  %s3 = inlined_call_operand.vmem [shape: bf16[256,256], index: 3, kind: input, shape index: {}]
  %s4 = inlined_call_operand.vmem [shape: f32[1,256], index: 4, kind: input, shape index: {}]
  %s5 = inlined_call_operand.vmem [shape: bf16[256,256], index: 5, kind: input, shape index: {}]
  %s6 = inlined_call_operand.vmem [shape: f32[1,256], index: 6, kind: input, shape index: {}]
  %s7 = inlined_call_operand.vmem [shape: f32[1,256], index: 7, kind: input, shape index: {}]
  %s8 = inlined_call_operand.<no memory space> [shape: f32[1,1], index: 8, kind: input, shape index: {}]
  %s9 = inlined_call_operand.vmem [shape: f32[512,1], index: 9, kind: output, shape index: {}]
  %s10 = sld [smem:[#allocation0]]
  $region69: #{dqfd_forward.1} parent=0
    _
  %s12 = ssub.s32 1, %s10
  %s13 = scalar_select 0, %s12, %s10
  %v14 = vstv %s8
  %15 = vst [vmem:[#allocation2] sm:$0x1] %v14
  loop: start=0, step=1, limit=4
  $region2: #{dqfd_forward.1} parent=0 // loop_pre_header
    _
  $region3: #{dqfd_forward.1} parent=0 // loop_header
    %s17 = sphi 0, %s21
    %p18 = scmp.ge.s32.totalorder %s17, 4
    %s27 = sphi 0, %s29
    %s30 = sphi 0, %s27
    %s31 = sphi 0, %s30
    %s47 = sphi 0, %s31
    %s51 = sphi 0, %s51
    %s53 = sphi 0, %s51
    %s54 = sphi 0, %s53
    %s68 = sphi 0, %s54
    %s72 = sphi 0, %s72
    %s74 = sphi 0, %s72
    %s75 = sphi 0, %s74
    %s89 = sphi 0, %s75
    %s93 = sphi 0, %s93
    %s95 = sphi 0, %s93
    %s96 = sphi 0, %s95
    %s110 = sphi 0, %s96
    %s114 = sphi 0, %s114
    %s116 = sphi 0, %s114
    %s117 = sphi 0, %s116
    %s131 = sphi 0, %s117
    %s135 = sphi 0, %s135
    %s137 = sphi 0, %s135
    %s138 = sphi 0, %s137
    %s152 = sphi 0, %s138
    %s156 = sphi 0, %s156
    %s158 = sphi 0, %s156
    %s159 = sphi 0, %s158
    %s173 = sphi 0, %s159
    %s177 = sphi 0, %s177
    %s179 = sphi 0, %s177
    %s180 = sphi 0, %s179
    %s194 = sphi 0, %s180
    %s198 = sphi 0, %s198
    %s200 = sphi 0, %s198
    %s201 = sphi 0, %s200
    %s215 = sphi 0, %s201
    %s221 = sphi 0, %s223
    %s224 = sphi 0, %s221
    %s225 = sphi 0, %s224
    %s241 = sphi 0, %s225
  $region4: #{dqfd_forward.1} parent=0 // loop_header_branch
    %20 = sbr.rel (%p18) target = $region8
  $region5: #{dqfd_forward.1} parent=0 // loop_body
    %s22 = ssub.s32 %s17, 1
    %s23 = ssub.s32 %s17, 2
    %s24 = sadd.s32 %s17, 1
    %s25 = ssub.s32 %s17, %s24
    %p26 = scmp.eq.s32.totalorder %s25, 0
    %s28 = sadd.s32 %s27, 1
    %s29 = scalar_select %p26, %s27, %s28
    %p32 = pneg %p26
    %p33 = scmp.eq.s32.totalorder %s17, 1
    %p34 = por %p32, %p33
    %p35 = scmp.ne.s32.totalorder %s27, %s30
    %p36 = scmp.eq.s32.totalorder %s17, 0
    %p37 = por %p35, %p36
    %p38 = scmp.ne.s32.totalorder %s27, %s30
    %p39 = scmp.eq.s32.totalorder %s22, 1
    %p40 = por %p38, %p39
    %p41 = scmp.ne.s32.totalorder %s30, %s31
    %p42 = scmp.eq.s32.totalorder %s22, 0
    %p43 = por %p41, %p42
    %p44 = scmp.ne.s32.totalorder %s30, %s31
    %p45 = scmp.eq.s32.totalorder %s23, 1
    %p46 = por %p44, %p45
    %p48 = scmp.ne.s32.totalorder %s31, %s47
    %p49 = scmp.eq.s32.totalorder %s23, 0
    %p50 = por %p48, %p49
    %s52 = sadd.s32 %s51, 1
    %p55 = scmp.eq.s32.totalorder %s17, 1
    %p56 = scmp.ne.s32.totalorder %s51, %s53
    %p57 = scmp.eq.s32.totalorder %s17, 0
    %p58 = por %p56, %p57
    %p59 = scmp.ne.s32.totalorder %s51, %s53
    %p60 = scmp.eq.s32.totalorder %s22, 1
    %p61 = por %p59, %p60
    %p62 = scmp.ne.s32.totalorder %s53, %s54
    %p63 = scmp.eq.s32.totalorder %s22, 0
    %p64 = por %p62, %p63
    %p65 = scmp.ne.s32.totalorder %s53, %s54
    %p66 = scmp.eq.s32.totalorder %s23, 1
    %p67 = por %p65, %p66
    %p69 = scmp.ne.s32.totalorder %s54, %s68
    %p70 = scmp.eq.s32.totalorder %s23, 0
    %p71 = por %p69, %p70
    %s73 = sadd.s32 %s72, 1
    %p76 = scmp.eq.s32.totalorder %s17, 1
    %p77 = scmp.ne.s32.totalorder %s72, %s74
    %p78 = scmp.eq.s32.totalorder %s17, 0
    %p79 = por %p77, %p78
    %p80 = scmp.ne.s32.totalorder %s72, %s74
    %p81 = scmp.eq.s32.totalorder %s22, 1
    %p82 = por %p80, %p81
    %p83 = scmp.ne.s32.totalorder %s74, %s75
    %p84 = scmp.eq.s32.totalorder %s22, 0
    %p85 = por %p83, %p84
    %p86 = scmp.ne.s32.totalorder %s74, %s75
    %p87 = scmp.eq.s32.totalorder %s23, 1
    %p88 = por %p86, %p87
    %p90 = scmp.ne.s32.totalorder %s75, %s89
    %p91 = scmp.eq.s32.totalorder %s23, 0
    %p92 = por %p90, %p91
    %s94 = sadd.s32 %s93, 1
    %p97 = scmp.eq.s32.totalorder %s17, 1
    %p98 = scmp.ne.s32.totalorder %s93, %s95
    %p99 = scmp.eq.s32.totalorder %s17, 0
    %p100 = por %p98, %p99
    %p101 = scmp.ne.s32.totalorder %s93, %s95
    %p102 = scmp.eq.s32.totalorder %s22, 1
    %p103 = por %p101, %p102
    %p104 = scmp.ne.s32.totalorder %s95, %s96
    %p105 = scmp.eq.s32.totalorder %s22, 0
    %p106 = por %p104, %p105
    %p107 = scmp.ne.s32.totalorder %s95, %s96
    %p108 = scmp.eq.s32.totalorder %s23, 1
    %p109 = por %p107, %p108
    %p111 = scmp.ne.s32.totalorder %s96, %s110
    %p112 = scmp.eq.s32.totalorder %s23, 0
    %p113 = por %p111, %p112
    %s115 = sadd.s32 %s114, 1
    %p118 = scmp.eq.s32.totalorder %s17, 1
    %p119 = scmp.ne.s32.totalorder %s114, %s116
    %p120 = scmp.eq.s32.totalorder %s17, 0
    %p121 = por %p119, %p120
    %p122 = scmp.ne.s32.totalorder %s114, %s116
    %p123 = scmp.eq.s32.totalorder %s22, 1
    %p124 = por %p122, %p123
    %p125 = scmp.ne.s32.totalorder %s116, %s117
    %p126 = scmp.eq.s32.totalorder %s22, 0
    %p127 = por %p125, %p126
    %p128 = scmp.ne.s32.totalorder %s116, %s117
    %p129 = scmp.eq.s32.totalorder %s23, 1
    %p130 = por %p128, %p129
    %p132 = scmp.ne.s32.totalorder %s117, %s131
    %p133 = scmp.eq.s32.totalorder %s23, 0
    %p134 = por %p132, %p133
    %s136 = sadd.s32 %s135, 1
    %p139 = scmp.eq.s32.totalorder %s17, 1
    %p140 = scmp.ne.s32.totalorder %s135, %s137
    %p141 = scmp.eq.s32.totalorder %s17, 0
    %p142 = por %p140, %p141
    %p143 = scmp.ne.s32.totalorder %s135, %s137
    %p144 = scmp.eq.s32.totalorder %s22, 1
    %p145 = por %p143, %p144
    %p146 = scmp.ne.s32.totalorder %s137, %s138
    %p147 = scmp.eq.s32.totalorder %s22, 0
    %p148 = por %p146, %p147
    %p149 = scmp.ne.s32.totalorder %s137, %s138
    %p150 = scmp.eq.s32.totalorder %s23, 1
    %p151 = por %p149, %p150
    %p153 = scmp.ne.s32.totalorder %s138, %s152
    %p154 = scmp.eq.s32.totalorder %s23, 0
    %p155 = por %p153, %p154
    %s157 = sadd.s32 %s156, 1
    %p160 = scmp.eq.s32.totalorder %s17, 1
    %p161 = scmp.ne.s32.totalorder %s156, %s158
    %p162 = scmp.eq.s32.totalorder %s17, 0
    %p163 = por %p161, %p162
    %p164 = scmp.ne.s32.totalorder %s156, %s158
    %p165 = scmp.eq.s32.totalorder %s22, 1
    %p166 = por %p164, %p165
    %p167 = scmp.ne.s32.totalorder %s158, %s159
    %p168 = scmp.eq.s32.totalorder %s22, 0
    %p169 = por %p167, %p168
    %p170 = scmp.ne.s32.totalorder %s158, %s159
    %p171 = scmp.eq.s32.totalorder %s23, 1
    %p172 = por %p170, %p171
    %p174 = scmp.ne.s32.totalorder %s159, %s173
    %p175 = scmp.eq.s32.totalorder %s23, 0
    %p176 = por %p174, %p175
    %s178 = sadd.s32 %s177, 1
    %p181 = scmp.eq.s32.totalorder %s17, 1
    %p182 = scmp.ne.s32.totalorder %s177, %s179
    %p183 = scmp.eq.s32.totalorder %s17, 0
    %p184 = por %p182, %p183
    %p185 = scmp.ne.s32.totalorder %s177, %s179
    %p186 = scmp.eq.s32.totalorder %s22, 1
    %p187 = por %p185, %p186
    %p188 = scmp.ne.s32.totalorder %s179, %s180
    %p189 = scmp.eq.s32.totalorder %s22, 0
    %p190 = por %p188, %p189
    %p191 = scmp.ne.s32.totalorder %s179, %s180
    %p192 = scmp.eq.s32.totalorder %s23, 1
    %p193 = por %p191, %p192
    %p195 = scmp.ne.s32.totalorder %s180, %s194
    %p196 = scmp.eq.s32.totalorder %s23, 0
    %p197 = por %p195, %p196
    %s199 = sadd.s32 %s198, 1
    %p202 = scmp.eq.s32.totalorder %s17, 1
    %p203 = scmp.ne.s32.totalorder %s198, %s200
    %p204 = scmp.eq.s32.totalorder %s17, 0
    %p205 = por %p203, %p204
    %p206 = scmp.ne.s32.totalorder %s198, %s200
    %p207 = scmp.eq.s32.totalorder %s22, 1
    %p208 = por %p206, %p207
    %p209 = scmp.ne.s32.totalorder %s200, %s201
    %p210 = scmp.eq.s32.totalorder %s22, 0
    %p211 = por %p209, %p210
    %p212 = scmp.ne.s32.totalorder %s200, %s201
    %p213 = scmp.eq.s32.totalorder %s23, 1
    %p214 = por %p212, %p213
    %p216 = scmp.ne.s32.totalorder %s201, %s215
    %p217 = scmp.eq.s32.totalorder %s23, 0
    %p218 = por %p216, %p217
    %s219 = ssub.s32 %s17, %s24
    %p220 = scmp.eq.s32.totalorder %s219, 0
    %s222 = sadd.s32 %s221, 1
    %s223 = scalar_select %p220, %s221, %s222
    %p226 = pneg %p220
    %p227 = scmp.eq.s32.totalorder %s17, 1
    %p228 = por %p226, %p227
    %p229 = scmp.ne.s32.totalorder %s221, %s224
    %p230 = scmp.eq.s32.totalorder %s17, 0
    %p231 = por %p229, %p230
    %p232 = scmp.ne.s32.totalorder %s221, %s224
    %p233 = scmp.eq.s32.totalorder %s22, 1
    %p234 = por %p232, %p233
    %p235 = scmp.ne.s32.totalorder %s224, %s225
    %p236 = scmp.eq.s32.totalorder %s22, 0
    %p237 = por %p235, %p236
    %p238 = scmp.ne.s32.totalorder %s224, %s225
    %p239 = scmp.eq.s32.totalorder %s23, 1
    %p240 = por %p238, %p239
    %p242 = scmp.ne.s32.totalorder %s225, %s241
    %p243 = scmp.eq.s32.totalorder %s23, 0
    %p244 = por %p242, %p243
    %p245 = scmp.le.s32.totalorder 1, %s17
    %p246 = scmp.lt.s32.totalorder %s17, 3
    %p247 = pnand %p245, %p246
    %p248 = pneg %p247
    // Predicated region
    $region9: #{dqfd_forward.1} parent=5 // pred_check
      _
    $region10: #{dqfd_forward.1} parent=5 // pred_check_branch
      %250 = sbr.rel (%p247) target = $region12
    $region11: #{dqfd_forward.1} parent=5 // pred_region
      %s251 = ssub.s32 %s17, 1
      // Predicated region
      $region13: #{dqfd_forward.1} parent=11 // pred_check
        %p252 = pneg %p64
      $region14: #{dqfd_forward.1} parent=11 // pred_check_branch
        %254 = sbr.rel (%p252) target = $region16
      $region15: #{dqfd_forward.1} parent=11 // pred_region
        _
      $region16: #{dqfd_forward.1} parent=11 // pred_fallthru
        _
      // Predicated region
      $region17: #{dqfd_forward.1} parent=11 // pred_check
        %p255 = pneg %p85
      $region18: #{dqfd_forward.1} parent=11 // pred_check_branch
        %257 = sbr.rel (%p255) target = $region20
      $region19: #{dqfd_forward.1} parent=11 // pred_region
        _
      $region20: #{dqfd_forward.1} parent=11 // pred_fallthru
        _
      // Predicated region
      $region21: #{dqfd_forward.1} parent=11 // pred_check
        %p258 = pneg %p106
      $region22: #{dqfd_forward.1} parent=11 // pred_check_branch
        %260 = sbr.rel (%p258) target = $region24
      $region23: #{dqfd_forward.1} parent=11 // pred_region
        _
      $region24: #{dqfd_forward.1} parent=11 // pred_fallthru
        _
      // Predicated region
      $region25: #{dqfd_forward.1} parent=11 // pred_check
        %p261 = pneg %p127
      $region26: #{dqfd_forward.1} parent=11 // pred_check_branch
        %263 = sbr.rel (%p261) target = $region28
      $region27: #{dqfd_forward.1} parent=11 // pred_region
        _
      $region28: #{dqfd_forward.1} parent=11 // pred_fallthru
        _
      // Predicated region
      $region29: #{dqfd_forward.1} parent=11 // pred_check
        %p264 = pneg %p148
      $region30: #{dqfd_forward.1} parent=11 // pred_check_branch
        %266 = sbr.rel (%p264) target = $region32
      $region31: #{dqfd_forward.1} parent=11 // pred_region
        _
      $region32: #{dqfd_forward.1} parent=11 // pred_fallthru
        _
      // Predicated region
      $region33: #{dqfd_forward.1} parent=11 // pred_check
        %p267 = pneg %p169
      $region34: #{dqfd_forward.1} parent=11 // pred_check_branch
        %269 = sbr.rel (%p267) target = $region36
      $region35: #{dqfd_forward.1} parent=11 // pred_region
        _
      $region36: #{dqfd_forward.1} parent=11 // pred_fallthru
        _
      // Predicated region
      $region37: #{dqfd_forward.1} parent=11 // pred_check
        %p270 = pneg %p190
      $region38: #{dqfd_forward.1} parent=11 // pred_check_branch
        %272 = sbr.rel (%p270) target = $region40
      $region39: #{dqfd_forward.1} parent=11 // pred_region
        _
      $region40: #{dqfd_forward.1} parent=11 // pred_fallthru
        _
      // Predicated region
      $region41: #{dqfd_forward.1} parent=11 // pred_check
        %p273 = pneg %p211
      $region42: #{dqfd_forward.1} parent=11 // pred_check_branch
        %275 = sbr.rel (%p273) target = $region44
      $region43: #{dqfd_forward.1} parent=11 // pred_region
        _
      $region44: #{dqfd_forward.1} parent=11 // pred_fallthru
        _
    $region12: #{dqfd_forward.1} parent=5 // pred_fallthru
      _
    %p276 = scmp.lt.s32.totalorder %s17, 2
    // Predicated region
    $region45: #{dqfd_forward.1} parent=5 // pred_check
      %p277 = pneg %p276
    $region46: #{dqfd_forward.1} parent=5 // pred_check_branch
      %279 = sbr.rel (%p277) target = $region48
    $region47: #{dqfd_forward.1} parent=5 // pred_region
      // Predicated region
      $region49: #{dqfd_forward.1} parent=47 // pred_check
        %p280 = pneg %p37
      $region50: #{dqfd_forward.1} parent=47 // pred_check_branch
        %282 = sbr.rel (%p280) target = $region52
      $region51: #{dqfd_forward.1} parent=47 // pred_region
        %s283 = smul.u32 32, %s17
        %p284 = scmp.lt.s32.totalorder %s283, 63
        %s285 = scalar_select %p284, %s283, 63
        %s286 = smul.addr %s285, 8
        %s287 = scalar_lea.vmem %s0, %s286
        %s288 = smul.u32 32, %s17
      $region52: #{dqfd_forward.1} parent=47 // pred_fallthru
        _
    $region48: #{dqfd_forward.1} parent=5 // pred_fallthru
      _
    %p289 = scmp.le.s32.totalorder 1, %s17
    %p290 = scmp.lt.s32.totalorder %s17, 3
    %p291 = pnand %p289, %p290
    %p292 = pneg %p291
    // Predicated region
    $region53: #{dqfd_forward.1} parent=5 // pred_check
      _
    $region54: #{dqfd_forward.1} parent=5 // pred_check_branch
      %294 = sbr.rel (%p291) target = $region56
    $region55: #{dqfd_forward.1} parent=5 // pred_region
      %s295 = ssub.s32 %s17, 1
      %s296 = smul.u32 32, %s22
      %p297 = scmp.lt.s32.totalorder %s296, 63
      %s298 = scalar_select %p297, %s296, 63
      %s299 = smul.addr %s298, 8
      %s300 = scalar_lea.vmem %s0, %s299
      %p301 = pneg %p43
      %p302 = pneg %p40
      %p303 = pneg %p64
      %p304 = pneg %p61
      %p305 = pneg %p85
      %p306 = pneg %p82
      %p307 = pneg %p106
      %p308 = pneg %p103
      %p309 = pneg %p127
      %p310 = pneg %p124
      %p311 = pneg %p148
      %p312 = pneg %p145
      %p313 = pneg %p169
      %p314 = pneg %p166
      %p315 = pneg %p190
      %p316 = pneg %p187
      %p317 = pneg %p211
      %p318 = pneg %p208
      %p319 = pneg %p237
      %p320 = pneg %p234
      %s321 = smul.u32 32, %s22
      %p322 = scmp.lt.s32.totalorder %s321, 63
      %s323 = scalar_select %p322, %s321, 63
      %s324 = smul.addr %s323, 8
      %s325 = scalar_lea.vmem %s9, %s324
      %s326 = smul.u32 32, %s22
      %p327 = scmp.lt.s32.totalorder %s326, 63
      %s328 = scalar_select %p327, %s326, 63
      %s329 = smul.addr %s328, 8
      %s330 = scalar_lea.vmem %s0, %s329
      %s331 = smul.u32 32, %s22
      %s332 = smul.u32 32, %s22
      %p333 = scmp.lt.s32.totalorder %s332, 63
      %s334 = scalar_select %p333, %s332, 63
      %s335 = smul.addr %s334, 8
      %s336 = scalar_lea.vmem %s9, %s335
      %s337 = smul.u32 32, %s22
      %v338 = vld [vmem:[%s330] sm:$0xff]
      %v339 = vld [vmem:[%s330 + $0x8] sm:$0xff]
      %v340 = vld [vmem:[%s330 + $0x10] sm:$0xff]
      %v341 = vld [vmem:[%s330 + $0x18] sm:$0xff]
      %v342 = vld [vmem:[%s330 + $0x20] sm:$0xff]
      %v343 = vld [vmem:[%s330 + $0x28] sm:$0xff]
      %v344 = vld [vmem:[%s330 + $0x30] sm:$0xff]
      %v345 = vld [vmem:[%s330 + $0x38] sm:$0xff]
      %v346 = vld [vmem:[%s330 + $0x40] sm:$0xff]
      %v347 = vld [vmem:[%s330 + $0x48] sm:$0xff]
      %v348 = vld [vmem:[%s330 + $0x50] sm:$0xff]
      %v349 = vld [vmem:[%s330 + $0x58] sm:$0xff]
      %v350 = vld [vmem:[%s330 + $0x60] sm:$0xff]
      %v351 = vld [vmem:[%s330 + $0x68] sm:$0xff]
      %v352 = vld [vmem:[%s330 + $0x70] sm:$0xff]
      %v353 = vld [vmem:[%s330 + $0x78] sm:$0xff]
      %v354 = vld [vmem:[%s330 + $0x80] sm:$0xff]
      %v355 = vld [vmem:[%s330 + $0x88] sm:$0xff]
      %v356 = vld [vmem:[%s330 + $0x90] sm:$0xff]
      %v357 = vld [vmem:[%s330 + $0x98] sm:$0xff]
      %v358 = vld [vmem:[%s330 + $0xa0] sm:$0xff]
      %v359 = vld [vmem:[%s330 + $0xa8] sm:$0xff]
      %v360 = vld [vmem:[%s330 + $0xb0] sm:$0xff]
      %v361 = vld [vmem:[%s330 + $0xb8] sm:$0xff]
      %v362 = vld [vmem:[%s330 + $0xc0] sm:$0xff]
      %v363 = vld [vmem:[%s330 + $0xc8] sm:$0xff]
      %v364 = vld [vmem:[%s330 + $0xd0] sm:$0xff]
      %v365 = vld [vmem:[%s330 + $0xd8] sm:$0xff]
      %v366 = vld [vmem:[%s330 + $0xe0] sm:$0xff]
      %v367 = vld [vmem:[%s330 + $0xe8] sm:$0xff]
      %v368 = vld [vmem:[%s330 + $0xf0] sm:$0xff]
      %v369 = vld [vmem:[%s330 + $0xf8] sm:$0xff]
      %v370 = vld [vmem:[%s2] sm:$0x3]
      %v371 = vld [vmem:[%s1] ss:$4 sm:$0x3]
      %373 = vset.pattern.permute.xlu0 0
      %374 = vperm.xlu0 %373, %v338
      %v375 = vpop.permute.xlu0 %374
      %378 = vset.pattern.permute.xlu0 0
      %379 = vperm.xlu0 %378, %v339
      %v380 = vpop.permute.xlu0 %379
      %383 = vset.pattern.permute.xlu0 0
      %384 = vperm.xlu0 %383, %v340
      %v385 = vpop.permute.xlu0 %384
      %388 = vset.pattern.permute.xlu0 0
      %389 = vperm.xlu0 %388, %v341
      %v390 = vpop.permute.xlu0 %389
      %393 = vset.pattern.permute.xlu0 0
      %394 = vperm.xlu0 %393, %v342
      %v395 = vpop.permute.xlu0 %394
      %398 = vset.pattern.permute.xlu0 0
      %399 = vperm.xlu0 %398, %v343
      %v400 = vpop.permute.xlu0 %399
      %403 = vset.pattern.permute.xlu0 0
      %404 = vperm.xlu0 %403, %v344
      %v405 = vpop.permute.xlu0 %404
      %408 = vset.pattern.permute.xlu0 0
      %409 = vperm.xlu0 %408, %v345
      %v410 = vpop.permute.xlu0 %409
      %413 = vset.pattern.permute.xlu0 0
      %414 = vperm.xlu0 %413, %v346
      %v415 = vpop.permute.xlu0 %414
      %418 = vset.pattern.permute.xlu0 0
      %419 = vperm.xlu0 %418, %v347
      %v420 = vpop.permute.xlu0 %419
      %423 = vset.pattern.permute.xlu0 0
      %424 = vperm.xlu0 %423, %v348
      %v425 = vpop.permute.xlu0 %424
      %428 = vset.pattern.permute.xlu0 0
      %429 = vperm.xlu0 %428, %v349
      %v430 = vpop.permute.xlu0 %429
      %433 = vset.pattern.permute.xlu0 0
      %434 = vperm.xlu0 %433, %v350
      %v435 = vpop.permute.xlu0 %434
      %438 = vset.pattern.permute.xlu0 0
      %439 = vperm.xlu0 %438, %v351
      %v440 = vpop.permute.xlu0 %439
      %443 = vset.pattern.permute.xlu0 0
      %444 = vperm.xlu0 %443, %v352
      %v445 = vpop.permute.xlu0 %444
      %448 = vset.pattern.permute.xlu0 0
      %449 = vperm.xlu0 %448, %v353
      %v450 = vpop.permute.xlu0 %449
      %453 = vset.pattern.permute.xlu0 0
      %454 = vperm.xlu0 %453, %v354
      %v455 = vpop.permute.xlu0 %454
      %458 = vset.pattern.permute.xlu0 0
      %459 = vperm.xlu0 %458, %v355
      %v460 = vpop.permute.xlu0 %459
      %463 = vset.pattern.permute.xlu0 0
      %464 = vperm.xlu0 %463, %v356
      %v465 = vpop.permute.xlu0 %464
      %468 = vset.pattern.permute.xlu0 0
      %469 = vperm.xlu0 %468, %v357
      %v470 = vpop.permute.xlu0 %469
      %473 = vset.pattern.permute.xlu0 0
      %474 = vperm.xlu0 %473, %v358
      %v475 = vpop.permute.xlu0 %474
      %478 = vset.pattern.permute.xlu0 0
      %479 = vperm.xlu0 %478, %v359
      %v480 = vpop.permute.xlu0 %479
      %483 = vset.pattern.permute.xlu0 0
      %484 = vperm.xlu0 %483, %v360
      %v485 = vpop.permute.xlu0 %484
      %488 = vset.pattern.permute.xlu0 0
      %489 = vperm.xlu0 %488, %v361
      %v490 = vpop.permute.xlu0 %489
      %493 = vset.pattern.permute.xlu0 0
      %494 = vperm.xlu0 %493, %v362
      %v495 = vpop.permute.xlu0 %494
      %498 = vset.pattern.permute.xlu0 0
      %499 = vperm.xlu0 %498, %v363
      %v500 = vpop.permute.xlu0 %499
      %503 = vset.pattern.permute.xlu0 0
      %504 = vperm.xlu0 %503, %v364
      %v505 = vpop.permute.xlu0 %504
      %508 = vset.pattern.permute.xlu0 0
      %509 = vperm.xlu0 %508, %v365
      %v510 = vpop.permute.xlu0 %509
      %513 = vset.pattern.permute.xlu0 0
      %514 = vperm.xlu0 %513, %v366
      %v515 = vpop.permute.xlu0 %514
      %518 = vset.pattern.permute.xlu0 0
      %519 = vperm.xlu0 %518, %v367
      %v520 = vpop.permute.xlu0 %519
      %523 = vset.pattern.permute.xlu0 0
      %524 = vperm.xlu0 %523, %v368
      %v525 = vpop.permute.xlu0 %524
      %528 = vset.pattern.permute.xlu0 0
      %529 = vperm.xlu0 %528, %v369
      %v530 = vpop.permute.xlu0 %529
      %v533 = vlaneseq
      %v534 = vshrl.u32 %v533, 7
      %v535 = vsub.s32 0, %v534
      %v536 = vrot.slane %v371, %v535
      %v537 = vlaneseq
      %v538 = vshrl.u32 %v537, 7
      %v539 = vsub.s32 1, %v538
      %v540 = vrot.slane %v371, %v539
      %v543 = vmul.f32 %v375, %v536
      %v544 = vmul.f32 %v375, %v540
      %v545 = vmul.f32 %v380, %v536
      %v546 = vmul.f32 %v380, %v540
      %v547 = vmul.f32 %v385, %v536
      %v548 = vmul.f32 %v385, %v540
      %v549 = vmul.f32 %v390, %v536
      %v550 = vmul.f32 %v390, %v540
      %v551 = vmul.f32 %v395, %v536
      %v552 = vmul.f32 %v395, %v540
      %v553 = vmul.f32 %v400, %v536
      %v554 = vmul.f32 %v400, %v540
      %v555 = vmul.f32 %v405, %v536
      %v556 = vmul.f32 %v405, %v540
      %v557 = vmul.f32 %v410, %v536
      %v558 = vmul.f32 %v410, %v540
      %v559 = vmul.f32 %v415, %v536
      %v560 = vmul.f32 %v415, %v540
      %v561 = vmul.f32 %v420, %v536
      %v562 = vmul.f32 %v420, %v540
      %v563 = vmul.f32 %v425, %v536
      %v564 = vmul.f32 %v425, %v540
      %v565 = vmul.f32 %v430, %v536
      %v566 = vmul.f32 %v430, %v540
      %v567 = vmul.f32 %v435, %v536
      %v568 = vmul.f32 %v435, %v540
      %v569 = vmul.f32 %v440, %v536
      %v570 = vmul.f32 %v440, %v540
      %v571 = vmul.f32 %v445, %v536
      %v572 = vmul.f32 %v445, %v540
      %v573 = vmul.f32 %v450, %v536
      %v574 = vmul.f32 %v450, %v540
      %v575 = vmul.f32 %v455, %v536
      %v576 = vmul.f32 %v455, %v540
      %v577 = vmul.f32 %v460, %v536
      %v578 = vmul.f32 %v460, %v540
      %v579 = vmul.f32 %v465, %v536
      %v580 = vmul.f32 %v465, %v540
      %v581 = vmul.f32 %v470, %v536
      %v582 = vmul.f32 %v470, %v540
      %v583 = vmul.f32 %v475, %v536
      %v584 = vmul.f32 %v475, %v540
      %v585 = vmul.f32 %v480, %v536
      %v586 = vmul.f32 %v480, %v540
      %v587 = vmul.f32 %v485, %v536
      %v588 = vmul.f32 %v485, %v540
      %v589 = vmul.f32 %v490, %v536
      %v590 = vmul.f32 %v490, %v540
      %v591 = vmul.f32 %v495, %v536
      %v592 = vmul.f32 %v495, %v540
      %v593 = vmul.f32 %v500, %v536
      %v594 = vmul.f32 %v500, %v540
      %v595 = vmul.f32 %v505, %v536
      %v596 = vmul.f32 %v505, %v540
      %v597 = vmul.f32 %v510, %v536
      %v598 = vmul.f32 %v510, %v540
      %v599 = vmul.f32 %v515, %v536
      %v600 = vmul.f32 %v515, %v540
      %v601 = vmul.f32 %v520, %v536
      %v602 = vmul.f32 %v520, %v540
      %v603 = vmul.f32 %v525, %v536
      %v604 = vmul.f32 %v525, %v540
      %v605 = vmul.f32 %v530, %v536
      %v606 = vmul.f32 %v530, %v540
      %v608 = vlaneseq
      %v609 = vshrl.u32 %v608, 7
      %v610 = vsub.s32 0, %v609
      %v611 = vrot.slane %v370, %v610
      %v612 = vlaneseq
      %v613 = vshrl.u32 %v612, 7
      %v614 = vsub.s32 1, %v613
      %v615 = vrot.slane %v370, %v614
      %v618 = vadd.f32 %v611, %v543
      %v619 = vadd.f32 %v615, %v544
      %v620 = vadd.f32 %v611, %v545
      %v621 = vadd.f32 %v615, %v546
      %v622 = vadd.f32 %v611, %v547
      %v623 = vadd.f32 %v615, %v548
      %v624 = vadd.f32 %v611, %v549
      %v625 = vadd.f32 %v615, %v550
      %v626 = vadd.f32 %v611, %v551
      %v627 = vadd.f32 %v615, %v552
      %v628 = vadd.f32 %v611, %v553
      %v629 = vadd.f32 %v615, %v554
      %v630 = vadd.f32 %v611, %v555
      %v631 = vadd.f32 %v615, %v556
      %v632 = vadd.f32 %v611, %v557
      %v633 = vadd.f32 %v615, %v558
      %v634 = vadd.f32 %v611, %v559
      %v635 = vadd.f32 %v615, %v560
      %v636 = vadd.f32 %v611, %v561
      %v637 = vadd.f32 %v615, %v562
      %v638 = vadd.f32 %v611, %v563
      %v639 = vadd.f32 %v615, %v564
      %v640 = vadd.f32 %v611, %v565
      %v641 = vadd.f32 %v615, %v566
      %v642 = vadd.f32 %v611, %v567
      %v643 = vadd.f32 %v615, %v568
      %v644 = vadd.f32 %v611, %v569
      %v645 = vadd.f32 %v615, %v570
      %v646 = vadd.f32 %v611, %v571
      %v647 = vadd.f32 %v615, %v572
      %v648 = vadd.f32 %v611, %v573
      %v649 = vadd.f32 %v615, %v574
      %v650 = vadd.f32 %v611, %v575
      %v651 = vadd.f32 %v615, %v576
      %v652 = vadd.f32 %v611, %v577
      %v653 = vadd.f32 %v615, %v578
      %v654 = vadd.f32 %v611, %v579
      %v655 = vadd.f32 %v615, %v580
      %v656 = vadd.f32 %v611, %v581
      %v657 = vadd.f32 %v615, %v582
      %v658 = vadd.f32 %v611, %v583
      %v659 = vadd.f32 %v615, %v584
      %v660 = vadd.f32 %v611, %v585
      %v661 = vadd.f32 %v615, %v586
      %v662 = vadd.f32 %v611, %v587
      %v663 = vadd.f32 %v615, %v588
      %v664 = vadd.f32 %v611, %v589
      %v665 = vadd.f32 %v615, %v590
      %v666 = vadd.f32 %v611, %v591
      %v667 = vadd.f32 %v615, %v592
      %v668 = vadd.f32 %v611, %v593
      %v669 = vadd.f32 %v615, %v594
      %v670 = vadd.f32 %v611, %v595
      %v671 = vadd.f32 %v615, %v596
      %v672 = vadd.f32 %v611, %v597
      %v673 = vadd.f32 %v615, %v598
      %v674 = vadd.f32 %v611, %v599
      %v675 = vadd.f32 %v615, %v600
      %v676 = vadd.f32 %v611, %v601
      %v677 = vadd.f32 %v615, %v602
      %v678 = vadd.f32 %v611, %v603
      %v679 = vadd.f32 %v615, %v604
      %v680 = vadd.f32 %v611, %v605
      %v681 = vadd.f32 %v615, %v606
      %s682 = scalar_lea.vmem %s1, 1
      %v683 = vld [vmem:[%s682] ss:$4 sm:$0x3]
      %684 = vset.pattern.permute.xlu0 1
      %685 = vperm.xlu0 %684, %v338
      %v686 = vpop.permute.xlu0 %685
      %688 = vset.pattern.permute.xlu0 1
      %689 = vperm.xlu0 %688, %v339
      %v690 = vpop.permute.xlu0 %689
      %692 = vset.pattern.permute.xlu0 1
      %693 = vperm.xlu0 %692, %v340
      %v694 = vpop.permute.xlu0 %693
      %696 = vset.pattern.permute.xlu0 1
      %697 = vperm.xlu0 %696, %v341
      %v698 = vpop.permute.xlu0 %697
      %700 = vset.pattern.permute.xlu0 1
      %701 = vperm.xlu0 %700, %v342
      %v702 = vpop.permute.xlu0 %701
      %704 = vset.pattern.permute.xlu0 1
      %705 = vperm.xlu0 %704, %v343
      %v706 = vpop.permute.xlu0 %705
      %708 = vset.pattern.permute.xlu0 1
      %709 = vperm.xlu0 %708, %v344
      %v710 = vpop.permute.xlu0 %709
      %712 = vset.pattern.permute.xlu0 1
      %713 = vperm.xlu0 %712, %v345
      %v714 = vpop.permute.xlu0 %713
      %716 = vset.pattern.permute.xlu0 1
      %717 = vperm.xlu0 %716, %v346
      %v718 = vpop.permute.xlu0 %717
      %720 = vset.pattern.permute.xlu0 1
      %721 = vperm.xlu0 %720, %v347
      %v722 = vpop.permute.xlu0 %721
      %724 = vset.pattern.permute.xlu0 1
      %725 = vperm.xlu0 %724, %v348
      %v726 = vpop.permute.xlu0 %725
      %728 = vset.pattern.permute.xlu0 1
      %729 = vperm.xlu0 %728, %v349
      %v730 = vpop.permute.xlu0 %729
      %732 = vset.pattern.permute.xlu0 1
      %733 = vperm.xlu0 %732, %v350
      %v734 = vpop.permute.xlu0 %733
      %736 = vset.pattern.permute.xlu0 1
      %737 = vperm.xlu0 %736, %v351
      %v738 = vpop.permute.xlu0 %737
      %740 = vset.pattern.permute.xlu0 1
      %741 = vperm.xlu0 %740, %v352
      %v742 = vpop.permute.xlu0 %741
      %744 = vset.pattern.permute.xlu0 1
      %745 = vperm.xlu0 %744, %v353
      %v746 = vpop.permute.xlu0 %745
      %748 = vset.pattern.permute.xlu0 1
      %749 = vperm.xlu0 %748, %v354
      %v750 = vpop.permute.xlu0 %749
      %752 = vset.pattern.permute.xlu0 1
      %753 = vperm.xlu0 %752, %v355
      %v754 = vpop.permute.xlu0 %753
      %756 = vset.pattern.permute.xlu0 1
      %757 = vperm.xlu0 %756, %v356
      %v758 = vpop.permute.xlu0 %757
      %760 = vset.pattern.permute.xlu0 1
      %761 = vperm.xlu0 %760, %v357
      %v762 = vpop.permute.xlu0 %761
      %764 = vset.pattern.permute.xlu0 1
      %765 = vperm.xlu0 %764, %v358
      %v766 = vpop.permute.xlu0 %765
      %768 = vset.pattern.permute.xlu0 1
      %769 = vperm.xlu0 %768, %v359
      %v770 = vpop.permute.xlu0 %769
      %772 = vset.pattern.permute.xlu0 1
      %773 = vperm.xlu0 %772, %v360
      %v774 = vpop.permute.xlu0 %773
      %776 = vset.pattern.permute.xlu0 1
      %777 = vperm.xlu0 %776, %v361
      %v778 = vpop.permute.xlu0 %777
      %780 = vset.pattern.permute.xlu0 1
      %781 = vperm.xlu0 %780, %v362
      %v782 = vpop.permute.xlu0 %781
      %784 = vset.pattern.permute.xlu0 1
      %785 = vperm.xlu0 %784, %v363
      %v786 = vpop.permute.xlu0 %785
      %788 = vset.pattern.permute.xlu0 1
      %789 = vperm.xlu0 %788, %v364
      %v790 = vpop.permute.xlu0 %789
      %792 = vset.pattern.permute.xlu0 1
      %793 = vperm.xlu0 %792, %v365
      %v794 = vpop.permute.xlu0 %793
      %796 = vset.pattern.permute.xlu0 1
      %797 = vperm.xlu0 %796, %v366
      %v798 = vpop.permute.xlu0 %797
      %800 = vset.pattern.permute.xlu0 1
      %801 = vperm.xlu0 %800, %v367
      %v802 = vpop.permute.xlu0 %801
      %804 = vset.pattern.permute.xlu0 1
      %805 = vperm.xlu0 %804, %v368
      %v806 = vpop.permute.xlu0 %805
      %808 = vset.pattern.permute.xlu0 1
      %809 = vperm.xlu0 %808, %v369
      %v810 = vpop.permute.xlu0 %809
      %v813 = vlaneseq
      %v814 = vshrl.u32 %v813, 7
      %v815 = vsub.s32 0, %v814
      %v816 = vrot.slane %v683, %v815
      %v817 = vlaneseq
      %v818 = vshrl.u32 %v817, 7
      %v819 = vsub.s32 1, %v818
      %v820 = vrot.slane %v683, %v819
      %v823 = vmul.f32 %v686, %v816
      %v824 = vmul.f32 %v686, %v820
      %v825 = vmul.f32 %v690, %v816
      %v826 = vmul.f32 %v690, %v820
      %v827 = vmul.f32 %v694, %v816
      %v828 = vmul.f32 %v694, %v820
      %v829 = vmul.f32 %v698, %v816
      %v830 = vmul.f32 %v698, %v820
      %v831 = vmul.f32 %v702, %v816
      %v832 = vmul.f32 %v702, %v820
      %v833 = vmul.f32 %v706, %v816
      %v834 = vmul.f32 %v706, %v820
      %v835 = vmul.f32 %v710, %v816
      %v836 = vmul.f32 %v710, %v820
      %v837 = vmul.f32 %v714, %v816
      %v838 = vmul.f32 %v714, %v820
      %v839 = vmul.f32 %v718, %v816
      %v840 = vmul.f32 %v718, %v820
      %v841 = vmul.f32 %v722, %v816
      %v842 = vmul.f32 %v722, %v820
      %v843 = vmul.f32 %v726, %v816
      %v844 = vmul.f32 %v726, %v820
      %v845 = vmul.f32 %v730, %v816
      %v846 = vmul.f32 %v730, %v820
      %v847 = vmul.f32 %v734, %v816
      %v848 = vmul.f32 %v734, %v820
      %v849 = vmul.f32 %v738, %v816
      %v850 = vmul.f32 %v738, %v820
      %v851 = vmul.f32 %v742, %v816
      %v852 = vmul.f32 %v742, %v820
      %v853 = vmul.f32 %v746, %v816
      %v854 = vmul.f32 %v746, %v820
      %v855 = vmul.f32 %v750, %v816
      %v856 = vmul.f32 %v750, %v820
      %v857 = vmul.f32 %v754, %v816
      %v858 = vmul.f32 %v754, %v820
      %v859 = vmul.f32 %v758, %v816
      %v860 = vmul.f32 %v758, %v820
      %v861 = vmul.f32 %v762, %v816
      %v862 = vmul.f32 %v762, %v820
      %v863 = vmul.f32 %v766, %v816
      %v864 = vmul.f32 %v766, %v820
      %v865 = vmul.f32 %v770, %v816
      %v866 = vmul.f32 %v770, %v820
      %v867 = vmul.f32 %v774, %v816
      %v868 = vmul.f32 %v774, %v820
      %v869 = vmul.f32 %v778, %v816
      %v870 = vmul.f32 %v778, %v820
      %v871 = vmul.f32 %v782, %v816
      %v872 = vmul.f32 %v782, %v820
      %v873 = vmul.f32 %v786, %v816
      %v874 = vmul.f32 %v786, %v820
      %v875 = vmul.f32 %v790, %v816
      %v876 = vmul.f32 %v790, %v820
      %v877 = vmul.f32 %v794, %v816
      %v878 = vmul.f32 %v794, %v820
      %v879 = vmul.f32 %v798, %v816
      %v880 = vmul.f32 %v798, %v820
      %v881 = vmul.f32 %v802, %v816
      %v882 = vmul.f32 %v802, %v820
      %v883 = vmul.f32 %v806, %v816
      %v884 = vmul.f32 %v806, %v820
      %v885 = vmul.f32 %v810, %v816
      %v886 = vmul.f32 %v810, %v820
      %v887 = vadd.f32 %v618, %v823
      %v888 = vadd.f32 %v619, %v824
      %v889 = vadd.f32 %v620, %v825
      %v890 = vadd.f32 %v621, %v826
      %v891 = vadd.f32 %v622, %v827
      %v892 = vadd.f32 %v623, %v828
      %v893 = vadd.f32 %v624, %v829
      %v894 = vadd.f32 %v625, %v830
      %v895 = vadd.f32 %v626, %v831
      %v896 = vadd.f32 %v627, %v832
      %v897 = vadd.f32 %v628, %v833
      %v898 = vadd.f32 %v629, %v834
      %v899 = vadd.f32 %v630, %v835
      %v900 = vadd.f32 %v631, %v836
      %v901 = vadd.f32 %v632, %v837
      %v902 = vadd.f32 %v633, %v838
      %v903 = vadd.f32 %v634, %v839
      %v904 = vadd.f32 %v635, %v840
      %v905 = vadd.f32 %v636, %v841
      %v906 = vadd.f32 %v637, %v842
      %v907 = vadd.f32 %v638, %v843
      %v908 = vadd.f32 %v639, %v844
      %v909 = vadd.f32 %v640, %v845
      %v910 = vadd.f32 %v641, %v846
      %v911 = vadd.f32 %v642, %v847
      %v912 = vadd.f32 %v643, %v848
      %v913 = vadd.f32 %v644, %v849
      %v914 = vadd.f32 %v645, %v850
      %v915 = vadd.f32 %v646, %v851
      %v916 = vadd.f32 %v647, %v852
      %v917 = vadd.f32 %v648, %v853
      %v918 = vadd.f32 %v649, %v854
      %v919 = vadd.f32 %v650, %v855
      %v920 = vadd.f32 %v651, %v856
      %v921 = vadd.f32 %v652, %v857
      %v922 = vadd.f32 %v653, %v858
      %v923 = vadd.f32 %v654, %v859
      %v924 = vadd.f32 %v655, %v860
      %v925 = vadd.f32 %v656, %v861
      %v926 = vadd.f32 %v657, %v862
      %v927 = vadd.f32 %v658, %v863
      %v928 = vadd.f32 %v659, %v864
      %v929 = vadd.f32 %v660, %v865
      %v930 = vadd.f32 %v661, %v866
      %v931 = vadd.f32 %v662, %v867
      %v932 = vadd.f32 %v663, %v868
      %v933 = vadd.f32 %v664, %v869
      %v934 = vadd.f32 %v665, %v870
      %v935 = vadd.f32 %v666, %v871
      %v936 = vadd.f32 %v667, %v872
      %v937 = vadd.f32 %v668, %v873
      %v938 = vadd.f32 %v669, %v874
      %v939 = vadd.f32 %v670, %v875
      %v940 = vadd.f32 %v671, %v876
      %v941 = vadd.f32 %v672, %v877
      %v942 = vadd.f32 %v673, %v878
      %v943 = vadd.f32 %v674, %v879
      %v944 = vadd.f32 %v675, %v880
      %v945 = vadd.f32 %v676, %v881
      %v946 = vadd.f32 %v677, %v882
      %v947 = vadd.f32 %v678, %v883
      %v948 = vadd.f32 %v679, %v884
      %v949 = vadd.f32 %v680, %v885
      %v950 = vadd.f32 %v681, %v886
      %s951 = scalar_lea.vmem %s1, 2
      %v952 = vld [vmem:[%s951] ss:$4 sm:$0x3]
      %953 = vset.pattern.permute.xlu0 2
      %954 = vperm.xlu0 %953, %v338
      %v955 = vpop.permute.xlu0 %954
      %957 = vset.pattern.permute.xlu0 2
      %958 = vperm.xlu0 %957, %v339
      %v959 = vpop.permute.xlu0 %958
      %961 = vset.pattern.permute.xlu0 2
      %962 = vperm.xlu0 %961, %v340
      %v963 = vpop.permute.xlu0 %962
      %965 = vset.pattern.permute.xlu0 2
      %966 = vperm.xlu0 %965, %v341
      %v967 = vpop.permute.xlu0 %966
      %969 = vset.pattern.permute.xlu0 2
      %970 = vperm.xlu0 %969, %v342
      %v971 = vpop.permute.xlu0 %970
      %973 = vset.pattern.permute.xlu0 2
      %974 = vperm.xlu0 %973, %v343
      %v975 = vpop.permute.xlu0 %974
      %977 = vset.pattern.permute.xlu0 2
      %978 = vperm.xlu0 %977, %v344
      %v979 = vpop.permute.xlu0 %978
      %981 = vset.pattern.permute.xlu0 2
      %982 = vperm.xlu0 %981, %v345
      %v983 = vpop.permute.xlu0 %982
      %985 = vset.pattern.permute.xlu0 2
      %986 = vperm.xlu0 %985, %v346
      %v987 = vpop.permute.xlu0 %986
      %989 = vset.pattern.permute.xlu0 2
      %990 = vperm.xlu0 %989, %v347
      %v991 = vpop.permute.xlu0 %990
      %993 = vset.pattern.permute.xlu0 2
      %994 = vperm.xlu0 %993, %v348
      %v995 = vpop.permute.xlu0 %994
      %997 = vset.pattern.permute.xlu0 2
      %998 = vperm.xlu0 %997, %v349
      %v999 = vpop.permute.xlu0 %998
      %1001 = vset.pattern.permute.xlu0 2
      %1002 = vperm.xlu0 %1001, %v350
      %v1003 = vpop.permute.xlu0 %1002
      %1005 = vset.pattern.permute.xlu0 2
      %1006 = vperm.xlu0 %1005, %v351
      %v1007 = vpop.permute.xlu0 %1006
      %1009 = vset.pattern.permute.xlu0 2
      %1010 = vperm.xlu0 %1009, %v352
      %v1011 = vpop.permute.xlu0 %1010
      %1013 = vset.pattern.permute.xlu0 2
      %1014 = vperm.xlu0 %1013, %v353
      %v1015 = vpop.permute.xlu0 %1014
      %1017 = vset.pattern.permute.xlu0 2
      %1018 = vperm.xlu0 %1017, %v354
      %v1019 = vpop.permute.xlu0 %1018
      %1021 = vset.pattern.permute.xlu0 2
      %1022 = vperm.xlu0 %1021, %v355
      %v1023 = vpop.permute.xlu0 %1022
      %1025 = vset.pattern.permute.xlu0 2
      %1026 = vperm.xlu0 %1025, %v356
      %v1027 = vpop.permute.xlu0 %1026
      %1029 = vset.pattern.permute.xlu0 2
      %1030 = vperm.xlu0 %1029, %v357
      %v1031 = vpop.permute.xlu0 %1030
      %1033 = vset.pattern.permute.xlu0 2
      %1034 = vperm.xlu0 %1033, %v358
      %v1035 = vpop.permute.xlu0 %1034
      %1037 = vset.pattern.permute.xlu0 2
      %1038 = vperm.xlu0 %1037, %v359
      %v1039 = vpop.permute.xlu0 %1038
      %1041 = vset.pattern.permute.xlu0 2
      %1042 = vperm.xlu0 %1041, %v360
      %v1043 = vpop.permute.xlu0 %1042
      %1045 = vset.pattern.permute.xlu0 2
      %1046 = vperm.xlu0 %1045, %v361
      %v1047 = vpop.permute.xlu0 %1046
      %1049 = vset.pattern.permute.xlu0 2
      %1050 = vperm.xlu0 %1049, %v362
      %v1051 = vpop.permute.xlu0 %1050
      %1053 = vset.pattern.permute.xlu0 2
      %1054 = vperm.xlu0 %1053, %v363
      %v1055 = vpop.permute.xlu0 %1054
      %1057 = vset.pattern.permute.xlu0 2
      %1058 = vperm.xlu0 %1057, %v364
      %v1059 = vpop.permute.xlu0 %1058
      %1061 = vset.pattern.permute.xlu0 2
      %1062 = vperm.xlu0 %1061, %v365
      %v1063 = vpop.permute.xlu0 %1062
      %1065 = vset.pattern.permute.xlu0 2
      %1066 = vperm.xlu0 %1065, %v366
      %v1067 = vpop.permute.xlu0 %1066
      %1069 = vset.pattern.permute.xlu0 2
      %1070 = vperm.xlu0 %1069, %v367
      %v1071 = vpop.permute.xlu0 %1070
      %1073 = vset.pattern.permute.xlu0 2
      %1074 = vperm.xlu0 %1073, %v368
      %v1075 = vpop.permute.xlu0 %1074
      %1077 = vset.pattern.permute.xlu0 2
      %1078 = vperm.xlu0 %1077, %v369
      %v1079 = vpop.permute.xlu0 %1078
      %v1082 = vlaneseq
      %v1083 = vshrl.u32 %v1082, 7
      %v1084 = vsub.s32 0, %v1083
      %v1085 = vrot.slane %v952, %v1084
      %v1086 = vlaneseq
      %v1087 = vshrl.u32 %v1086, 7
      %v1088 = vsub.s32 1, %v1087
      %v1089 = vrot.slane %v952, %v1088
      %v1092 = vmul.f32 %v955, %v1085
      %v1093 = vmul.f32 %v955, %v1089
      %v1094 = vmul.f32 %v959, %v1085
      %v1095 = vmul.f32 %v959, %v1089
      %v1096 = vmul.f32 %v963, %v1085
      %v1097 = vmul.f32 %v963, %v1089
      %v1098 = vmul.f32 %v967, %v1085
      %v1099 = vmul.f32 %v967, %v1089
      %v1100 = vmul.f32 %v971, %v1085
      %v1101 = vmul.f32 %v971, %v1089
      %v1102 = vmul.f32 %v975, %v1085
      %v1103 = vmul.f32 %v975, %v1089
      %v1104 = vmul.f32 %v979, %v1085
      %v1105 = vmul.f32 %v979, %v1089
      %v1106 = vmul.f32 %v983, %v1085
      %v1107 = vmul.f32 %v983, %v1089
      %v1108 = vmul.f32 %v987, %v1085
      %v1109 = vmul.f32 %v987, %v1089
      %v1110 = vmul.f32 %v991, %v1085
      %v1111 = vmul.f32 %v991, %v1089
      %v1112 = vmul.f32 %v995, %v1085
      %v1113 = vmul.f32 %v995, %v1089
      %v1114 = vmul.f32 %v999, %v1085
      %v1115 = vmul.f32 %v999, %v1089
      %v1116 = vmul.f32 %v1003, %v1085
      %v1117 = vmul.f32 %v1003, %v1089
      %v1118 = vmul.f32 %v1007, %v1085
      %v1119 = vmul.f32 %v1007, %v1089
      %v1120 = vmul.f32 %v1011, %v1085
      %v1121 = vmul.f32 %v1011, %v1089
      %v1122 = vmul.f32 %v1015, %v1085
      %v1123 = vmul.f32 %v1015, %v1089
      %v1124 = vmul.f32 %v1019, %v1085
      %v1125 = vmul.f32 %v1019, %v1089
      %v1126 = vmul.f32 %v1023, %v1085
      %v1127 = vmul.f32 %v1023, %v1089
      %v1128 = vmul.f32 %v1027, %v1085
      %v1129 = vmul.f32 %v1027, %v1089
      %v1130 = vmul.f32 %v1031, %v1085
      %v1131 = vmul.f32 %v1031, %v1089
      %v1132 = vmul.f32 %v1035, %v1085
      %v1133 = vmul.f32 %v1035, %v1089
      %v1134 = vmul.f32 %v1039, %v1085
      %v1135 = vmul.f32 %v1039, %v1089
      %v1136 = vmul.f32 %v1043, %v1085
      %v1137 = vmul.f32 %v1043, %v1089
      %v1138 = vmul.f32 %v1047, %v1085
      %v1139 = vmul.f32 %v1047, %v1089
      %v1140 = vmul.f32 %v1051, %v1085
      %v1141 = vmul.f32 %v1051, %v1089
      %v1142 = vmul.f32 %v1055, %v1085
      %v1143 = vmul.f32 %v1055, %v1089
      %v1144 = vmul.f32 %v1059, %v1085
      %v1145 = vmul.f32 %v1059, %v1089
      %v1146 = vmul.f32 %v1063, %v1085
      %v1147 = vmul.f32 %v1063, %v1089
      %v1148 = vmul.f32 %v1067, %v1085
      %v1149 = vmul.f32 %v1067, %v1089
      %v1150 = vmul.f32 %v1071, %v1085
      %v1151 = vmul.f32 %v1071, %v1089
      %v1152 = vmul.f32 %v1075, %v1085
      %v1153 = vmul.f32 %v1075, %v1089
      %v1154 = vmul.f32 %v1079, %v1085
      %v1155 = vmul.f32 %v1079, %v1089
      %v1156 = vadd.f32 %v887, %v1092
      %v1157 = vadd.f32 %v888, %v1093
      %v1158 = vadd.f32 %v889, %v1094
      %v1159 = vadd.f32 %v890, %v1095
      %v1160 = vadd.f32 %v891, %v1096
      %v1161 = vadd.f32 %v892, %v1097
      %v1162 = vadd.f32 %v893, %v1098
      %v1163 = vadd.f32 %v894, %v1099
      %v1164 = vadd.f32 %v895, %v1100
      %v1165 = vadd.f32 %v896, %v1101
      %v1166 = vadd.f32 %v897, %v1102
      %v1167 = vadd.f32 %v898, %v1103
      %v1168 = vadd.f32 %v899, %v1104
      %v1169 = vadd.f32 %v900, %v1105
      %v1170 = vadd.f32 %v901, %v1106
      %v1171 = vadd.f32 %v902, %v1107
      %v1172 = vadd.f32 %v903, %v1108
      %v1173 = vadd.f32 %v904, %v1109
      %v1174 = vadd.f32 %v905, %v1110
      %v1175 = vadd.f32 %v906, %v1111
      %v1176 = vadd.f32 %v907, %v1112
      %v1177 = vadd.f32 %v908, %v1113
      %v1178 = vadd.f32 %v909, %v1114
      %v1179 = vadd.f32 %v910, %v1115
      %v1180 = vadd.f32 %v911, %v1116
      %v1181 = vadd.f32 %v912, %v1117
      %v1182 = vadd.f32 %v913, %v1118
      %v1183 = vadd.f32 %v914, %v1119
      %v1184 = vadd.f32 %v915, %v1120
      %v1185 = vadd.f32 %v916, %v1121
      %v1186 = vadd.f32 %v917, %v1122
      %v1187 = vadd.f32 %v918, %v1123
      %v1188 = vadd.f32 %v919, %v1124
      %v1189 = vadd.f32 %v920, %v1125
      %v1190 = vadd.f32 %v921, %v1126
      %v1191 = vadd.f32 %v922, %v1127
      %v1192 = vadd.f32 %v923, %v1128
      %v1193 = vadd.f32 %v924, %v1129
      %v1194 = vadd.f32 %v925, %v1130
      %v1195 = vadd.f32 %v926, %v1131
      %v1196 = vadd.f32 %v927, %v1132
      %v1197 = vadd.f32 %v928, %v1133
      %v1198 = vadd.f32 %v929, %v1134
      %v1199 = vadd.f32 %v930, %v1135
      %v1200 = vadd.f32 %v931, %v1136
      %v1201 = vadd.f32 %v932, %v1137
      %v1202 = vadd.f32 %v933, %v1138
      %v1203 = vadd.f32 %v934, %v1139
      %v1204 = vadd.f32 %v935, %v1140
      %v1205 = vadd.f32 %v936, %v1141
      %v1206 = vadd.f32 %v937, %v1142
      %v1207 = vadd.f32 %v938, %v1143
      %v1208 = vadd.f32 %v939, %v1144
      %v1209 = vadd.f32 %v940, %v1145
      %v1210 = vadd.f32 %v941, %v1146
      %v1211 = vadd.f32 %v942, %v1147
      %v1212 = vadd.f32 %v943, %v1148
      %v1213 = vadd.f32 %v944, %v1149
      %v1214 = vadd.f32 %v945, %v1150
      %v1215 = vadd.f32 %v946, %v1151
      %v1216 = vadd.f32 %v947, %v1152
      %v1217 = vadd.f32 %v948, %v1153
      %v1218 = vadd.f32 %v949, %v1154
      %v1219 = vadd.f32 %v950, %v1155
      %s1220 = scalar_lea.vmem %s1, 3
      %v1221 = vld [vmem:[%s1220] ss:$4 sm:$0x3]
      %1222 = vset.pattern.permute.xlu0 3
      %1223 = vperm.xlu0 %1222, %v338
      %v1224 = vpop.permute.xlu0 %1223
      %1226 = vset.pattern.permute.xlu0 3
      %1227 = vperm.xlu0 %1226, %v339
      %v1228 = vpop.permute.xlu0 %1227
      %1230 = vset.pattern.permute.xlu0 3
      %1231 = vperm.xlu0 %1230, %v340
      %v1232 = vpop.permute.xlu0 %1231
      %1234 = vset.pattern.permute.xlu0 3
      %1235 = vperm.xlu0 %1234, %v341
      %v1236 = vpop.permute.xlu0 %1235
      %1238 = vset.pattern.permute.xlu0 3
      %1239 = vperm.xlu0 %1238, %v342
      %v1240 = vpop.permute.xlu0 %1239
      %1242 = vset.pattern.permute.xlu0 3
      %1243 = vperm.xlu0 %1242, %v343
      %v1244 = vpop.permute.xlu0 %1243
      %1246 = vset.pattern.permute.xlu0 3
      %1247 = vperm.xlu0 %1246, %v344
      %v1248 = vpop.permute.xlu0 %1247
      %1250 = vset.pattern.permute.xlu0 3
      %1251 = vperm.xlu0 %1250, %v345
      %v1252 = vpop.permute.xlu0 %1251
      %1254 = vset.pattern.permute.xlu0 3
      %1255 = vperm.xlu0 %1254, %v346
      %v1256 = vpop.permute.xlu0 %1255
      %1258 = vset.pattern.permute.xlu0 3
      %1259 = vperm.xlu0 %1258, %v347
      %v1260 = vpop.permute.xlu0 %1259
      %1262 = vset.pattern.permute.xlu0 3
      %1263 = vperm.xlu0 %1262, %v348
      %v1264 = vpop.permute.xlu0 %1263
      %1266 = vset.pattern.permute.xlu0 3
      %1267 = vperm.xlu0 %1266, %v349
      %v1268 = vpop.permute.xlu0 %1267
      %1270 = vset.pattern.permute.xlu0 3
      %1271 = vperm.xlu0 %1270, %v350
      %v1272 = vpop.permute.xlu0 %1271
      %1274 = vset.pattern.permute.xlu0 3
      %1275 = vperm.xlu0 %1274, %v351
      %v1276 = vpop.permute.xlu0 %1275
      %1278 = vset.pattern.permute.xlu0 3
      %1279 = vperm.xlu0 %1278, %v352
      %v1280 = vpop.permute.xlu0 %1279
      %1282 = vset.pattern.permute.xlu0 3
      %1283 = vperm.xlu0 %1282, %v353
      %v1284 = vpop.permute.xlu0 %1283
      %1286 = vset.pattern.permute.xlu0 3
      %1287 = vperm.xlu0 %1286, %v354
      %v1288 = vpop.permute.xlu0 %1287
      %1290 = vset.pattern.permute.xlu0 3
      %1291 = vperm.xlu0 %1290, %v355
      %v1292 = vpop.permute.xlu0 %1291
      %1294 = vset.pattern.permute.xlu0 3
      %1295 = vperm.xlu0 %1294, %v356
      %v1296 = vpop.permute.xlu0 %1295
      %1298 = vset.pattern.permute.xlu0 3
      %1299 = vperm.xlu0 %1298, %v357
      %v1300 = vpop.permute.xlu0 %1299
      %1302 = vset.pattern.permute.xlu0 3
      %1303 = vperm.xlu0 %1302, %v358
      %v1304 = vpop.permute.xlu0 %1303
      %1306 = vset.pattern.permute.xlu0 3
      %1307 = vperm.xlu0 %1306, %v359
      %v1308 = vpop.permute.xlu0 %1307
      %1310 = vset.pattern.permute.xlu0 3
      %1311 = vperm.xlu0 %1310, %v360
      %v1312 = vpop.permute.xlu0 %1311
      %1314 = vset.pattern.permute.xlu0 3
      %1315 = vperm.xlu0 %1314, %v361
      %v1316 = vpop.permute.xlu0 %1315
      %1318 = vset.pattern.permute.xlu0 3
      %1319 = vperm.xlu0 %1318, %v362
      %v1320 = vpop.permute.xlu0 %1319
      %1322 = vset.pattern.permute.xlu0 3
      %1323 = vperm.xlu0 %1322, %v363
      %v1324 = vpop.permute.xlu0 %1323
      %1326 = vset.pattern.permute.xlu0 3
      %1327 = vperm.xlu0 %1326, %v364
      %v1328 = vpop.permute.xlu0 %1327
      %1330 = vset.pattern.permute.xlu0 3
      %1331 = vperm.xlu0 %1330, %v365
      %v1332 = vpop.permute.xlu0 %1331
      %1334 = vset.pattern.permute.xlu0 3
      %1335 = vperm.xlu0 %1334, %v366
      %v1336 = vpop.permute.xlu0 %1335
      %1338 = vset.pattern.permute.xlu0 3
      %1339 = vperm.xlu0 %1338, %v367
      %v1340 = vpop.permute.xlu0 %1339
      %1342 = vset.pattern.permute.xlu0 3
      %1343 = vperm.xlu0 %1342, %v368
      %v1344 = vpop.permute.xlu0 %1343
      %1346 = vset.pattern.permute.xlu0 3
      %1347 = vperm.xlu0 %1346, %v369
      %v1348 = vpop.permute.xlu0 %1347
      %v1351 = vlaneseq
      %v1352 = vshrl.u32 %v1351, 7
      %v1353 = vsub.s32 0, %v1352
      %v1354 = vrot.slane %v1221, %v1353
      %v1355 = vlaneseq
      %v1356 = vshrl.u32 %v1355, 7
      %v1357 = vsub.s32 1, %v1356
      %v1358 = vrot.slane %v1221, %v1357
      %v1361 = vmul.f32 %v1224, %v1354
      %v1362 = vmul.f32 %v1224, %v1358
      %v1363 = vmul.f32 %v1228, %v1354
      %v1364 = vmul.f32 %v1228, %v1358
      %v1365 = vmul.f32 %v1232, %v1354
      %v1366 = vmul.f32 %v1232, %v1358
      %v1367 = vmul.f32 %v1236, %v1354
      %v1368 = vmul.f32 %v1236, %v1358
      %v1369 = vmul.f32 %v1240, %v1354
      %v1370 = vmul.f32 %v1240, %v1358
      %v1371 = vmul.f32 %v1244, %v1354
      %v1372 = vmul.f32 %v1244, %v1358
      %v1373 = vmul.f32 %v1248, %v1354
      %v1374 = vmul.f32 %v1248, %v1358
      %v1375 = vmul.f32 %v1252, %v1354
      %v1376 = vmul.f32 %v1252, %v1358
      %v1377 = vmul.f32 %v1256, %v1354
      %v1378 = vmul.f32 %v1256, %v1358
      %v1379 = vmul.f32 %v1260, %v1354
      %v1380 = vmul.f32 %v1260, %v1358
      %v1381 = vmul.f32 %v1264, %v1354
      %v1382 = vmul.f32 %v1264, %v1358
      %v1383 = vmul.f32 %v1268, %v1354
      %v1384 = vmul.f32 %v1268, %v1358
      %v1385 = vmul.f32 %v1272, %v1354
      %v1386 = vmul.f32 %v1272, %v1358
      %v1387 = vmul.f32 %v1276, %v1354
      %v1388 = vmul.f32 %v1276, %v1358
      %v1389 = vmul.f32 %v1280, %v1354
      %v1390 = vmul.f32 %v1280, %v1358
      %v1391 = vmul.f32 %v1284, %v1354
      %v1392 = vmul.f32 %v1284, %v1358
      %v1393 = vmul.f32 %v1288, %v1354
      %v1394 = vmul.f32 %v1288, %v1358
      %v1395 = vmul.f32 %v1292, %v1354
      %v1396 = vmul.f32 %v1292, %v1358
      %v1397 = vmul.f32 %v1296, %v1354
      %v1398 = vmul.f32 %v1296, %v1358
      %v1399 = vmul.f32 %v1300, %v1354
      %v1400 = vmul.f32 %v1300, %v1358
      %v1401 = vmul.f32 %v1304, %v1354
      %v1402 = vmul.f32 %v1304, %v1358
      %v1403 = vmul.f32 %v1308, %v1354
      %v1404 = vmul.f32 %v1308, %v1358
      %v1405 = vmul.f32 %v1312, %v1354
      %v1406 = vmul.f32 %v1312, %v1358
      %v1407 = vmul.f32 %v1316, %v1354
      %v1408 = vmul.f32 %v1316, %v1358
      %v1409 = vmul.f32 %v1320, %v1354
      %v1410 = vmul.f32 %v1320, %v1358
      %v1411 = vmul.f32 %v1324, %v1354
      %v1412 = vmul.f32 %v1324, %v1358
      %v1413 = vmul.f32 %v1328, %v1354
      %v1414 = vmul.f32 %v1328, %v1358
      %v1415 = vmul.f32 %v1332, %v1354
      %v1416 = vmul.f32 %v1332, %v1358
      %v1417 = vmul.f32 %v1336, %v1354
      %v1418 = vmul.f32 %v1336, %v1358
      %v1419 = vmul.f32 %v1340, %v1354
      %v1420 = vmul.f32 %v1340, %v1358
      %v1421 = vmul.f32 %v1344, %v1354
      %v1422 = vmul.f32 %v1344, %v1358
      %v1423 = vmul.f32 %v1348, %v1354
      %v1424 = vmul.f32 %v1348, %v1358
      %v1425 = vadd.f32 %v1156, %v1361
      %v1426 = vadd.f32 %v1157, %v1362
      %v1427 = vadd.f32 %v1158, %v1363
      %v1428 = vadd.f32 %v1159, %v1364
      %v1429 = vadd.f32 %v1160, %v1365
      %v1430 = vadd.f32 %v1161, %v1366
      %v1431 = vadd.f32 %v1162, %v1367
      %v1432 = vadd.f32 %v1163, %v1368
      %v1433 = vadd.f32 %v1164, %v1369
      %v1434 = vadd.f32 %v1165, %v1370
      %v1435 = vadd.f32 %v1166, %v1371
      %v1436 = vadd.f32 %v1167, %v1372
      %v1437 = vadd.f32 %v1168, %v1373
      %v1438 = vadd.f32 %v1169, %v1374
      %v1439 = vadd.f32 %v1170, %v1375
      %v1440 = vadd.f32 %v1171, %v1376
      %v1441 = vadd.f32 %v1172, %v1377
      %v1442 = vadd.f32 %v1173, %v1378
      %v1443 = vadd.f32 %v1174, %v1379
      %v1444 = vadd.f32 %v1175, %v1380
      %v1445 = vadd.f32 %v1176, %v1381
      %v1446 = vadd.f32 %v1177, %v1382
      %v1447 = vadd.f32 %v1178, %v1383
      %v1448 = vadd.f32 %v1179, %v1384
      %v1449 = vadd.f32 %v1180, %v1385
      %v1450 = vadd.f32 %v1181, %v1386
      %v1451 = vadd.f32 %v1182, %v1387
      %v1452 = vadd.f32 %v1183, %v1388
      %v1453 = vadd.f32 %v1184, %v1389
      %v1454 = vadd.f32 %v1185, %v1390
      %v1455 = vadd.f32 %v1186, %v1391
      %v1456 = vadd.f32 %v1187, %v1392
      %v1457 = vadd.f32 %v1188, %v1393
      %v1458 = vadd.f32 %v1189, %v1394
      %v1459 = vadd.f32 %v1190, %v1395
      %v1460 = vadd.f32 %v1191, %v1396
      %v1461 = vadd.f32 %v1192, %v1397
      %v1462 = vadd.f32 %v1193, %v1398
      %v1463 = vadd.f32 %v1194, %v1399
      %v1464 = vadd.f32 %v1195, %v1400
      %v1465 = vadd.f32 %v1196, %v1401
      %v1466 = vadd.f32 %v1197, %v1402
      %v1467 = vadd.f32 %v1198, %v1403
      %v1468 = vadd.f32 %v1199, %v1404
      %v1469 = vadd.f32 %v1200, %v1405
      %v1470 = vadd.f32 %v1201, %v1406
      %v1471 = vadd.f32 %v1202, %v1407
      %v1472 = vadd.f32 %v1203, %v1408
      %v1473 = vadd.f32 %v1204, %v1409
      %v1474 = vadd.f32 %v1205, %v1410
      %v1475 = vadd.f32 %v1206, %v1411
      %v1476 = vadd.f32 %v1207, %v1412
      %v1477 = vadd.f32 %v1208, %v1413
      %v1478 = vadd.f32 %v1209, %v1414
      %v1479 = vadd.f32 %v1210, %v1415
      %v1480 = vadd.f32 %v1211, %v1416
      %v1481 = vadd.f32 %v1212, %v1417
      %v1482 = vadd.f32 %v1213, %v1418
      %v1483 = vadd.f32 %v1214, %v1419
      %v1484 = vadd.f32 %v1215, %v1420
      %v1485 = vadd.f32 %v1216, %v1421
      %v1486 = vadd.f32 %v1217, %v1422
      %v1487 = vadd.f32 %v1218, %v1423
      %v1488 = vadd.f32 %v1219, %v1424
      %v1489 = vpack.c.bf16 %v1427, %v1425
      %v1490 = vpack.c.bf16 %v1428, %v1426
      %v1491 = vpack.c.bf16 %v1431, %v1429
      %v1492 = vpack.c.bf16 %v1432, %v1430
      %v1493 = vpack.c.bf16 %v1435, %v1433
      %v1494 = vpack.c.bf16 %v1436, %v1434
      %v1495 = vpack.c.bf16 %v1439, %v1437
      %v1496 = vpack.c.bf16 %v1440, %v1438
      %v1497 = vpack.c.bf16 %v1443, %v1441
      %v1498 = vpack.c.bf16 %v1444, %v1442
      %v1499 = vpack.c.bf16 %v1447, %v1445
      %v1500 = vpack.c.bf16 %v1448, %v1446
      %v1501 = vpack.c.bf16 %v1451, %v1449
      %v1502 = vpack.c.bf16 %v1452, %v1450
      %v1503 = vpack.c.bf16 %v1455, %v1453
      %v1504 = vpack.c.bf16 %v1456, %v1454
      %v1505 = vpack.c.bf16 %v1459, %v1457
      %v1506 = vpack.c.bf16 %v1460, %v1458
      %v1507 = vpack.c.bf16 %v1463, %v1461
      %v1508 = vpack.c.bf16 %v1464, %v1462
      %v1509 = vpack.c.bf16 %v1467, %v1465
      %v1510 = vpack.c.bf16 %v1468, %v1466
      %v1511 = vpack.c.bf16 %v1471, %v1469
      %v1512 = vpack.c.bf16 %v1472, %v1470
      %v1513 = vpack.c.bf16 %v1475, %v1473
      %v1514 = vpack.c.bf16 %v1476, %v1474
      %v1515 = vpack.c.bf16 %v1479, %v1477
      %v1516 = vpack.c.bf16 %v1480, %v1478
      %v1517 = vpack.c.bf16 %v1483, %v1481
      %v1518 = vpack.c.bf16 %v1484, %v1482
      %v1519 = vpack.c.bf16 %v1487, %v1485
      %v1520 = vpack.c.bf16 %v1488, %v1486
      %v1521 = vld [vmem:[%s3] sm:$0xff]
      %v1522 = vld [vmem:[%s3 + $0x8] sm:$0xff]
      %v1523 = vld [vmem:[%s3 + $0x10] sm:$0xff]
      %v1524 = vld [vmem:[%s3 + $0x18] sm:$0xff]
      %v1525 = vld [vmem:[%s3 + $0x20] sm:$0xff]
      %v1526 = vld [vmem:[%s3 + $0x28] sm:$0xff]
      %v1527 = vld [vmem:[%s3 + $0x30] sm:$0xff]
      %v1528 = vld [vmem:[%s3 + $0x38] sm:$0xff]
      %v1529 = vld [vmem:[%s3 + $0x40] sm:$0xff]
      %v1530 = vld [vmem:[%s3 + $0x48] sm:$0xff]
      %v1531 = vld [vmem:[%s3 + $0x50] sm:$0xff]
      %v1532 = vld [vmem:[%s3 + $0x58] sm:$0xff]
      %v1533 = vld [vmem:[%s3 + $0x60] sm:$0xff]
      %v1534 = vld [vmem:[%s3 + $0x68] sm:$0xff]
      %v1535 = vld [vmem:[%s3 + $0x70] sm:$0xff]
      %v1536 = vld [vmem:[%s3 + $0x78] sm:$0xff]
      %v1537 = vld [vmem:[%s3 + $0x80] sm:$0xff]
      %v1538 = vld [vmem:[%s3 + $0x88] sm:$0xff]
      %v1539 = vld [vmem:[%s3 + $0x90] sm:$0xff]
      %v1540 = vld [vmem:[%s3 + $0x98] sm:$0xff]
      %v1541 = vld [vmem:[%s3 + $0xa0] sm:$0xff]
      %v1542 = vld [vmem:[%s3 + $0xa8] sm:$0xff]
      %v1543 = vld [vmem:[%s3 + $0xb0] sm:$0xff]
      %v1544 = vld [vmem:[%s3 + $0xb8] sm:$0xff]
      %v1545 = vld [vmem:[%s3 + $0xc0] sm:$0xff]
      %v1546 = vld [vmem:[%s3 + $0xc8] sm:$0xff]
      %v1547 = vld [vmem:[%s3 + $0xd0] sm:$0xff]
      %v1548 = vld [vmem:[%s3 + $0xd8] sm:$0xff]
      %v1549 = vld [vmem:[%s3 + $0xe0] sm:$0xff]
      %v1550 = vld [vmem:[%s3 + $0xe8] sm:$0xff]
      %v1551 = vld [vmem:[%s3 + $0xf0] sm:$0xff]
      %v1552 = vld [vmem:[%s3 + $0xf8] sm:$0xff]
      %v1553 = vld [vmem:[%s4] sm:$0x3]
      %v1555 = vlaneseq
      %v1556 = vshrl.u32 %v1555, 7
      %v1557 = vsub.s32 0, %v1556
      %v1558 = vrot.slane %v1553, %v1557
      %v1559 = vlaneseq
      %v1560 = vshrl.u32 %v1559, 7
      %v1561 = vsub.s32 1, %v1560
      %v1562 = vrot.slane %v1553, %v1561
      %v1597 = vunpack.c.l.b16 %v1521
      %v1598 = vunpack.c.h.b16 %v1521
      %v1599 = vunpack.c.l.b16 %v1522
      %v1600 = vunpack.c.h.b16 %v1522
      %v1601 = vunpack.c.l.b16 %v1523
      %v1602 = vunpack.c.h.b16 %v1523
      %v1603 = vunpack.c.l.b16 %v1524
      %v1604 = vunpack.c.h.b16 %v1524
      %v1605 = vunpack.c.l.b16 %v1525
      %v1606 = vunpack.c.h.b16 %v1525
      %v1607 = vunpack.c.l.b16 %v1526
      %v1608 = vunpack.c.h.b16 %v1526
      %v1609 = vunpack.c.l.b16 %v1527
      %v1610 = vunpack.c.h.b16 %v1527
      %v1611 = vunpack.c.l.b16 %v1528
      %v1612 = vunpack.c.h.b16 %v1528
      %v1613 = vunpack.c.l.b16 %v1529
      %v1614 = vunpack.c.h.b16 %v1529
      %v1615 = vunpack.c.l.b16 %v1530
      %v1616 = vunpack.c.h.b16 %v1530
      %v1617 = vunpack.c.l.b16 %v1531
      %v1618 = vunpack.c.h.b16 %v1531
      %v1619 = vunpack.c.l.b16 %v1532
      %v1620 = vunpack.c.h.b16 %v1532
      %v1621 = vunpack.c.l.b16 %v1533
      %v1622 = vunpack.c.h.b16 %v1533
      %v1623 = vunpack.c.l.b16 %v1534
      %v1624 = vunpack.c.h.b16 %v1534
      %v1625 = vunpack.c.l.b16 %v1535
      %v1626 = vunpack.c.h.b16 %v1535
      %v1627 = vunpack.c.l.b16 %v1536
      %v1628 = vunpack.c.h.b16 %v1536
      %v1629 = vunpack.c.l.b16 %v1537
      %v1630 = vunpack.c.h.b16 %v1537
      %v1631 = vunpack.c.l.b16 %v1538
      %v1632 = vunpack.c.h.b16 %v1538
      %v1633 = vunpack.c.l.b16 %v1539
      %v1634 = vunpack.c.h.b16 %v1539
      %v1635 = vunpack.c.l.b16 %v1540
      %v1636 = vunpack.c.h.b16 %v1540
      %v1637 = vunpack.c.l.b16 %v1541
      %v1638 = vunpack.c.h.b16 %v1541
      %v1639 = vunpack.c.l.b16 %v1542
      %v1640 = vunpack.c.h.b16 %v1542
      %v1641 = vunpack.c.l.b16 %v1543
      %v1642 = vunpack.c.h.b16 %v1543
      %v1643 = vunpack.c.l.b16 %v1544
      %v1644 = vunpack.c.h.b16 %v1544
      %v1645 = vunpack.c.l.b16 %v1545
      %v1646 = vunpack.c.h.b16 %v1545
      %v1647 = vunpack.c.l.b16 %v1546
      %v1648 = vunpack.c.h.b16 %v1546
      %v1649 = vunpack.c.l.b16 %v1547
      %v1650 = vunpack.c.h.b16 %v1547
      %v1651 = vunpack.c.l.b16 %v1548
      %v1652 = vunpack.c.h.b16 %v1548
      %v1653 = vunpack.c.l.b16 %v1549
      %v1654 = vunpack.c.h.b16 %v1549
      %v1655 = vunpack.c.l.b16 %v1550
      %v1656 = vunpack.c.h.b16 %v1550
      %v1657 = vunpack.c.l.b16 %v1551
      %v1658 = vunpack.c.h.b16 %v1551
      %v1659 = vunpack.c.l.b16 %v1552
      %v1660 = vunpack.c.h.b16 %v1552
      %v1661 = vpack.c.b16 %v1599, %v1597
      %v1662 = vpack.c.b16 %v1600, %v1598
      %v1663 = vpack.c.b16 %v1603, %v1601
      %v1664 = vpack.c.b16 %v1604, %v1602
      %v1665 = vpack.c.b16 %v1607, %v1605
      %v1666 = vpack.c.b16 %v1608, %v1606
      %v1667 = vpack.c.b16 %v1611, %v1609
      %v1668 = vpack.c.b16 %v1612, %v1610
      %v1669 = vpack.c.b16 %v1615, %v1613
      %v1670 = vpack.c.b16 %v1616, %v1614
      %v1671 = vpack.c.b16 %v1619, %v1617
      %v1672 = vpack.c.b16 %v1620, %v1618
      %v1673 = vpack.c.b16 %v1623, %v1621
      %v1674 = vpack.c.b16 %v1624, %v1622
      %v1675 = vpack.c.b16 %v1627, %v1625
      %v1676 = vpack.c.b16 %v1628, %v1626
      %v1677 = vpack.c.b16 %v1631, %v1629
      %v1678 = vpack.c.b16 %v1632, %v1630
      %v1679 = vpack.c.b16 %v1635, %v1633
      %v1680 = vpack.c.b16 %v1636, %v1634
      %v1681 = vpack.c.b16 %v1639, %v1637
      %v1682 = vpack.c.b16 %v1640, %v1638
      %v1683 = vpack.c.b16 %v1643, %v1641
      %v1684 = vpack.c.b16 %v1644, %v1642
      %v1685 = vpack.c.b16 %v1647, %v1645
      %v1686 = vpack.c.b16 %v1648, %v1646
      %v1687 = vpack.c.b16 %v1651, %v1649
      %v1688 = vpack.c.b16 %v1652, %v1650
      %v1689 = vpack.c.b16 %v1655, %v1653
      %v1690 = vpack.c.b16 %v1656, %v1654
      %v1691 = vpack.c.b16 %v1659, %v1657
      %v1692 = vpack.c.b16 %v1660, %v1658
      %1725 = vmatprep.subr.bf16.mxu0 %v1662
      %1726 = vmatpush1.bf16.msra.mxu0 %v1661
      %1727 = vmatprep.subr.bf16.mxu0 %v1664
      %1728 = vmatpush1.bf16.msra.mxu0 %v1663
      %1729 = vmatprep.subr.bf16.mxu0 %v1666
      %1730 = vmatpush1.bf16.msra.mxu0 %v1665
      %1731 = vmatprep.subr.bf16.mxu0 %v1668
      %1732 = vmatpush1.bf16.msra.mxu0 %v1667
      %1733 = vmatprep.subr.bf16.mxu0 %v1670
      %1734 = vmatpush1.bf16.msra.mxu0 %v1669
      %1735 = vmatprep.subr.bf16.mxu0 %v1672
      %1736 = vmatpush1.bf16.msra.mxu0 %v1671
      %1737 = vmatprep.subr.bf16.mxu0 %v1674
      %1738 = vmatpush1.bf16.msra.mxu0 %v1673
      %1739 = vmatprep.subr.bf16.mxu0 %v1676
      %1740 = vmatpush1.bf16.msra.mxu0 %v1675
      %1741 = vmatprep.subr.bf16.mxu0 %v1678
      %1742 = vmatpush1.bf16.msra.mxu0 %v1677
      %1743 = vmatprep.subr.bf16.mxu0 %v1680
      %1744 = vmatpush1.bf16.msra.mxu0 %v1679
      %1745 = vmatprep.subr.bf16.mxu0 %v1682
      %1746 = vmatpush1.bf16.msra.mxu0 %v1681
      %1747 = vmatprep.subr.bf16.mxu0 %v1684
      %1748 = vmatpush1.bf16.msra.mxu0 %v1683
      %1749 = vmatprep.subr.bf16.mxu0 %v1686
      %1750 = vmatpush1.bf16.msra.mxu0 %v1685
      %1751 = vmatprep.subr.bf16.mxu0 %v1688
      %1752 = vmatpush1.bf16.msra.mxu0 %v1687
      %1753 = vmatprep.subr.bf16.mxu0 %v1690
      %1754 = vmatpush1.bf16.msra.mxu0 %v1689
      %1755 = vmatprep.subr.bf16.mxu0 %v1692
      %1756 = vmatpush1.bf16.msra.mxu0 %v1691
      %1757 = vmatprep.mubr.bf16.mxu0 %v1490
      %1758 = vmatmul.mubr.bf16.gmra.mrb[0].mxu0 %v1489
      %v1759 = vpop.f32.mrb[0].mxu0
      %v1760 = vadd.f32 %v1558, %v1759
      %v1761 = vpop.f32.mrb[0].mxu0
      %v1762 = vadd.f32 %v1562, %v1761
      %v1763 = vpop.f32.mrb[0].mxu0
      %v1764 = vadd.f32 %v1558, %v1763
      %v1765 = vpop.f32.mrb[0].mxu0
      %v1766 = vadd.f32 %v1562, %v1765
      %1767 = vmatprep.mubr.bf16.mxu0 %v1492
      %1768 = vmatmul.mubr.bf16.gmra.mrb[0].mxu0 %v1491
      %v1769 = vpop.f32.mrb[0].mxu0
      %v1770 = vadd.f32 %v1558, %v1769
      %v1771 = vpop.f32.mrb[0].mxu0
      %v1772 = vadd.f32 %v1562, %v1771
      %v1773 = vpop.f32.mrb[0].mxu0
      %v1774 = vadd.f32 %v1558, %v1773
      %v1775 = vpop.f32.mrb[0].mxu0
      %v1776 = vadd.f32 %v1562, %v1775
      %1777 = vmatprep.mubr.bf16.mxu0 %v1494
      %1778 = vmatmul.mubr.bf16.gmra.mrb[0].mxu0 %v1493
      %v1779 = vpop.f32.mrb[0].mxu0
      %v1780 = vadd.f32 %v1558, %v1779
      %v1781 = vpop.f32.mrb[0].mxu0
      %v1782 = vadd.f32 %v1562, %v1781
      %v1783 = vpop.f32.mrb[0].mxu0
      %v1784 = vadd.f32 %v1558, %v1783
      %v1785 = vpop.f32.mrb[0].mxu0
      %v1786 = vadd.f32 %v1562, %v1785
      %1787 = vmatprep.mubr.bf16.mxu0 %v1496
      %1788 = vmatmul.mubr.bf16.gmra.mrb[0].mxu0 %v1495
      %v1789 = vpop.f32.mrb[0].mxu0
      %v1790 = vadd.f32 %v1558, %v1789
      %v1791 = vpop.f32.mrb[0].mxu0
      %v1792 = vadd.f32 %v1562, %v1791
      %v1793 = vpop.f32.mrb[0].mxu0
      %v1794 = vadd.f32 %v1558, %v1793
      %v1795 = vpop.f32.mrb[0].mxu0
      %v1796 = vadd.f32 %v1562, %v1795
      %1797 = vmatprep.mubr.bf16.mxu0 %v1498
      %1798 = vmatmul.mubr.bf16.gmra.mrb[0].mxu0 %v1497
      %v1799 = vpop.f32.mrb[0].mxu0
      %v1800 = vadd.f32 %v1558, %v1799
      %v1801 = vpop.f32.mrb[0].mxu0
      %v1802 = vadd.f32 %v1562, %v1801
      %v1803 = vpop.f32.mrb[0].mxu0
      %v1804 = vadd.f32 %v1558, %v1803
      %v1805 = vpop.f32.mrb[0].mxu0
      %v1806 = vadd.f32 %v1562, %v1805
      %1807 = vmatprep.mubr.bf16.mxu0 %v1500
      %1808 = vmatmul.mubr.bf16.gmra.mrb[0].mxu0 %v1499
      %v1809 = vpop.f32.mrb[0].mxu0
      %v1810 = vadd.f32 %v1558, %v1809
      %v1811 = vpop.f32.mrb[0].mxu0
      %v1812 = vadd.f32 %v1562, %v1811
      %v1813 = vpop.f32.mrb[0].mxu0
      %v1814 = vadd.f32 %v1558, %v1813
      %v1815 = vpop.f32.mrb[0].mxu0
      %v1816 = vadd.f32 %v1562, %v1815
      %1817 = vmatprep.mubr.bf16.mxu0 %v1502
      %1818 = vmatmul.mubr.bf16.gmra.mrb[0].mxu0 %v1501
      %v1819 = vpop.f32.mrb[0].mxu0
      %v1820 = vadd.f32 %v1558, %v1819
      %v1821 = vpop.f32.mrb[0].mxu0
      %v1822 = vadd.f32 %v1562, %v1821
      %v1823 = vpop.f32.mrb[0].mxu0
      %v1824 = vadd.f32 %v1558, %v1823
      %v1825 = vpop.f32.mrb[0].mxu0
      %v1826 = vadd.f32 %v1562, %v1825
      %1827 = vmatprep.mubr.bf16.mxu0 %v1504
      %1828 = vmatmul.mubr.bf16.gmra.mrb[0].mxu0 %v1503
      %v1829 = vpop.f32.mrb[0].mxu0
      %v1830 = vadd.f32 %v1558, %v1829
      %v1831 = vpop.f32.mrb[0].mxu0
      %v1832 = vadd.f32 %v1562, %v1831
      %v1833 = vpop.f32.mrb[0].mxu0
      %v1834 = vadd.f32 %v1558, %v1833
      %v1835 = vpop.f32.mrb[0].mxu0
      %v1836 = vadd.f32 %v1562, %v1835
      %1837 = vmatprep.mubr.bf16.mxu0 %v1506
      %1838 = vmatmul.mubr.bf16.gmra.mrb[0].mxu0 %v1505
      %v1839 = vpop.f32.mrb[0].mxu0
      %v1840 = vadd.f32 %v1558, %v1839
      %v1841 = vpop.f32.mrb[0].mxu0
      %v1842 = vadd.f32 %v1562, %v1841
      %v1843 = vpop.f32.mrb[0].mxu0
      %v1844 = vadd.f32 %v1558, %v1843
      %v1845 = vpop.f32.mrb[0].mxu0
      %v1846 = vadd.f32 %v1562, %v1845
      %1847 = vmatprep.mubr.bf16.mxu0 %v1508
      %1848 = vmatmul.mubr.bf16.gmra.mrb[0].mxu0 %v1507
      %v1849 = vpop.f32.mrb[0].mxu0
      %v1850 = vadd.f32 %v1558, %v1849
      %v1851 = vpop.f32.mrb[0].mxu0
      %v1852 = vadd.f32 %v1562, %v1851
      %v1853 = vpop.f32.mrb[0].mxu0
      %v1854 = vadd.f32 %v1558, %v1853
      %v1855 = vpop.f32.mrb[0].mxu0
      %v1856 = vadd.f32 %v1562, %v1855
      %1857 = vmatprep.mubr.bf16.mxu0 %v1510
      %1858 = vmatmul.mubr.bf16.gmra.mrb[0].mxu0 %v1509
      %v1859 = vpop.f32.mrb[0].mxu0
      %v1860 = vadd.f32 %v1558, %v1859
      %v1861 = vpop.f32.mrb[0].mxu0
      %v1862 = vadd.f32 %v1562, %v1861
      %v1863 = vpop.f32.mrb[0].mxu0
      %v1864 = vadd.f32 %v1558, %v1863
      %v1865 = vpop.f32.mrb[0].mxu0
      %v1866 = vadd.f32 %v1562, %v1865
      %1867 = vmatprep.mubr.bf16.mxu0 %v1512
      %1868 = vmatmul.mubr.bf16.gmra.mrb[0].mxu0 %v1511
      %v1869 = vpop.f32.mrb[0].mxu0
      %v1870 = vadd.f32 %v1558, %v1869
      %v1871 = vpop.f32.mrb[0].mxu0
      %v1872 = vadd.f32 %v1562, %v1871
      %v1873 = vpop.f32.mrb[0].mxu0
      %v1874 = vadd.f32 %v1558, %v1873
      %v1875 = vpop.f32.mrb[0].mxu0
      %v1876 = vadd.f32 %v1562, %v1875
      %1877 = vmatprep.mubr.bf16.mxu0 %v1514
      %1878 = vmatmul.mubr.bf16.gmra.mrb[0].mxu0 %v1513
      %v1879 = vpop.f32.mrb[0].mxu0
      %v1880 = vadd.f32 %v1558, %v1879
      %v1881 = vpop.f32.mrb[0].mxu0
      %v1882 = vadd.f32 %v1562, %v1881
      %v1883 = vpop.f32.mrb[0].mxu0
      %v1884 = vadd.f32 %v1558, %v1883
      %v1885 = vpop.f32.mrb[0].mxu0
      %v1886 = vadd.f32 %v1562, %v1885
      %1887 = vmatprep.mubr.bf16.mxu0 %v1516
      %1888 = vmatmul.mubr.bf16.gmra.mrb[0].mxu0 %v1515
      %v1889 = vpop.f32.mrb[0].mxu0
      %v1890 = vadd.f32 %v1558, %v1889
      %v1891 = vpop.f32.mrb[0].mxu0
      %v1892 = vadd.f32 %v1562, %v1891
      %v1893 = vpop.f32.mrb[0].mxu0
      %v1894 = vadd.f32 %v1558, %v1893
      %v1895 = vpop.f32.mrb[0].mxu0
      %v1896 = vadd.f32 %v1562, %v1895
      %1897 = vmatprep.mubr.bf16.mxu0 %v1518
      %1898 = vmatmul.mubr.bf16.gmra.mrb[0].mxu0 %v1517
      %v1899 = vpop.f32.mrb[0].mxu0
      %v1900 = vadd.f32 %v1558, %v1899
      %v1901 = vpop.f32.mrb[0].mxu0
      %v1902 = vadd.f32 %v1562, %v1901
      %v1903 = vpop.f32.mrb[0].mxu0
      %v1904 = vadd.f32 %v1558, %v1903
      %v1905 = vpop.f32.mrb[0].mxu0
      %v1906 = vadd.f32 %v1562, %v1905
      %1907 = vmatprep.mubr.bf16.mxu0 %v1520
      %1908 = vmatmul.mubr.bf16.gmra.mrb[0].mxu0 %v1519
      %v1909 = vpop.f32.mrb[0].mxu0
      %v1910 = vadd.f32 %v1558, %v1909
      %v1911 = vpop.f32.mrb[0].mxu0
      %v1912 = vadd.f32 %v1562, %v1911
      %v1913 = vpop.f32.mrb[0].mxu0
      %v1914 = vadd.f32 %v1558, %v1913
      %v1915 = vpop.f32.mrb[0].mxu0
      %v1916 = vadd.f32 %v1562, %v1915
      %1917 = vdwg.mxu0
      %v1918 = vmul.f32 %v1760, 0.01
      %v1919 = vmul.f32 %v1762, 0.01
      %v1920 = vmul.f32 %v1764, 0.01
      %v1921 = vmul.f32 %v1766, 0.01
      %v1922 = vmul.f32 %v1770, 0.01
      %v1923 = vmul.f32 %v1772, 0.01
      %v1924 = vmul.f32 %v1774, 0.01
      %v1925 = vmul.f32 %v1776, 0.01
      %v1926 = vmul.f32 %v1780, 0.01
      %v1927 = vmul.f32 %v1782, 0.01
      %v1928 = vmul.f32 %v1784, 0.01
      %v1929 = vmul.f32 %v1786, 0.01
      %v1930 = vmul.f32 %v1790, 0.01
      %v1931 = vmul.f32 %v1792, 0.01
      %v1932 = vmul.f32 %v1794, 0.01
      %v1933 = vmul.f32 %v1796, 0.01
      %v1934 = vmul.f32 %v1800, 0.01
      %v1935 = vmul.f32 %v1802, 0.01
      %v1936 = vmul.f32 %v1804, 0.01
      %v1937 = vmul.f32 %v1806, 0.01
      %v1938 = vmul.f32 %v1810, 0.01
      %v1939 = vmul.f32 %v1812, 0.01
      %v1940 = vmul.f32 %v1814, 0.01
      %v1941 = vmul.f32 %v1816, 0.01
      %v1942 = vmul.f32 %v1820, 0.01
      %v1943 = vmul.f32 %v1822, 0.01
      %v1944 = vmul.f32 %v1824, 0.01
      %v1945 = vmul.f32 %v1826, 0.01
      %v1946 = vmul.f32 %v1830, 0.01
      %v1947 = vmul.f32 %v1832, 0.01
      %v1948 = vmul.f32 %v1834, 0.01
      %v1949 = vmul.f32 %v1836, 0.01
      %v1950 = vmul.f32 %v1840, 0.01
      %v1951 = vmul.f32 %v1842, 0.01
      %v1952 = vmul.f32 %v1844, 0.01
      %v1953 = vmul.f32 %v1846, 0.01
      %v1954 = vmul.f32 %v1850, 0.01
      %v1955 = vmul.f32 %v1852, 0.01
      %v1956 = vmul.f32 %v1854, 0.01
      %v1957 = vmul.f32 %v1856, 0.01
      %v1958 = vmul.f32 %v1860, 0.01
      %v1959 = vmul.f32 %v1862, 0.01
      %v1960 = vmul.f32 %v1864, 0.01
      %v1961 = vmul.f32 %v1866, 0.01
      %v1962 = vmul.f32 %v1870, 0.01
      %v1963 = vmul.f32 %v1872, 0.01
      %v1964 = vmul.f32 %v1874, 0.01
      %v1965 = vmul.f32 %v1876, 0.01
      %v1966 = vmul.f32 %v1880, 0.01
      %v1967 = vmul.f32 %v1882, 0.01
      %v1968 = vmul.f32 %v1884, 0.01
      %v1969 = vmul.f32 %v1886, 0.01
      %v1970 = vmul.f32 %v1890, 0.01
      %v1971 = vmul.f32 %v1892, 0.01
      %v1972 = vmul.f32 %v1894, 0.01
      %v1973 = vmul.f32 %v1896, 0.01
      %v1974 = vmul.f32 %v1900, 0.01
      %v1975 = vmul.f32 %v1902, 0.01
      %v1976 = vmul.f32 %v1904, 0.01
      %v1977 = vmul.f32 %v1906, 0.01
      %v1978 = vmul.f32 %v1910, 0.01
      %v1979 = vmul.f32 %v1912, 0.01
      %v1980 = vmul.f32 %v1914, 0.01
      %v1981 = vmul.f32 %v1916, 0.01
      %v1982 = vmax.f32 %v1760, %v1918
      %v1983 = vmax.f32 %v1762, %v1919
      %v1984 = vmax.f32 %v1764, %v1920
      %v1985 = vmax.f32 %v1766, %v1921
      %v1986 = vmax.f32 %v1770, %v1922
      %v1987 = vmax.f32 %v1772, %v1923
      %v1988 = vmax.f32 %v1774, %v1924
      %v1989 = vmax.f32 %v1776, %v1925
      %v1990 = vmax.f32 %v1780, %v1926
      %v1991 = vmax.f32 %v1782, %v1927
      %v1992 = vmax.f32 %v1784, %v1928
      %v1993 = vmax.f32 %v1786, %v1929
      %v1994 = vmax.f32 %v1790, %v1930
      %v1995 = vmax.f32 %v1792, %v1931
      %v1996 = vmax.f32 %v1794, %v1932
      %v1997 = vmax.f32 %v1796, %v1933
      %v1998 = vmax.f32 %v1800, %v1934
      %v1999 = vmax.f32 %v1802, %v1935
      %v2000 = vmax.f32 %v1804, %v1936
      %v2001 = vmax.f32 %v1806, %v1937
      %v2002 = vmax.f32 %v1810, %v1938
      %v2003 = vmax.f32 %v1812, %v1939
      %v2004 = vmax.f32 %v1814, %v1940
      %v2005 = vmax.f32 %v1816, %v1941
      %v2006 = vmax.f32 %v1820, %v1942
      %v2007 = vmax.f32 %v1822, %v1943
      %v2008 = vmax.f32 %v1824, %v1944
      %v2009 = vmax.f32 %v1826, %v1945
      %v2010 = vmax.f32 %v1830, %v1946
      %v2011 = vmax.f32 %v1832, %v1947
      %v2012 = vmax.f32 %v1834, %v1948
      %v2013 = vmax.f32 %v1836, %v1949
      %v2014 = vmax.f32 %v1840, %v1950
      %v2015 = vmax.f32 %v1842, %v1951
      %v2016 = vmax.f32 %v1844, %v1952
      %v2017 = vmax.f32 %v1846, %v1953
      %v2018 = vmax.f32 %v1850, %v1954
      %v2019 = vmax.f32 %v1852, %v1955
      %v2020 = vmax.f32 %v1854, %v1956
      %v2021 = vmax.f32 %v1856, %v1957
      %v2022 = vmax.f32 %v1860, %v1958
      %v2023 = vmax.f32 %v1862, %v1959
      %v2024 = vmax.f32 %v1864, %v1960
      %v2025 = vmax.f32 %v1866, %v1961
      %v2026 = vmax.f32 %v1870, %v1962
      %v2027 = vmax.f32 %v1872, %v1963
      %v2028 = vmax.f32 %v1874, %v1964
      %v2029 = vmax.f32 %v1876, %v1965
      %v2030 = vmax.f32 %v1880, %v1966
      %v2031 = vmax.f32 %v1882, %v1967
      %v2032 = vmax.f32 %v1884, %v1968
      %v2033 = vmax.f32 %v1886, %v1969
      %v2034 = vmax.f32 %v1890, %v1970
      %v2035 = vmax.f32 %v1892, %v1971
      %v2036 = vmax.f32 %v1894, %v1972
      %v2037 = vmax.f32 %v1896, %v1973
      %v2038 = vmax.f32 %v1900, %v1974
      %v2039 = vmax.f32 %v1902, %v1975
      %v2040 = vmax.f32 %v1904, %v1976
      %v2041 = vmax.f32 %v1906, %v1977
      %v2042 = vmax.f32 %v1910, %v1978
      %v2043 = vmax.f32 %v1912, %v1979
      %v2044 = vmax.f32 %v1914, %v1980
      %v2045 = vmax.f32 %v1916, %v1981
      %v2046 = vpack.c.bf16 %v1984, %v1982
      %v2047 = vpack.c.bf16 %v1985, %v1983
      %v2048 = vpack.c.bf16 %v1988, %v1986
      %v2049 = vpack.c.bf16 %v1989, %v1987
      %v2050 = vpack.c.bf16 %v1992, %v1990
      %v2051 = vpack.c.bf16 %v1993, %v1991
      %v2052 = vpack.c.bf16 %v1996, %v1994
      %v2053 = vpack.c.bf16 %v1997, %v1995
      %v2054 = vpack.c.bf16 %v2000, %v1998
      %v2055 = vpack.c.bf16 %v2001, %v1999
      %v2056 = vpack.c.bf16 %v2004, %v2002
      %v2057 = vpack.c.bf16 %v2005, %v2003
      %v2058 = vpack.c.bf16 %v2008, %v2006
      %v2059 = vpack.c.bf16 %v2009, %v2007
      %v2060 = vpack.c.bf16 %v2012, %v2010
      %v2061 = vpack.c.bf16 %v2013, %v2011
      %v2062 = vpack.c.bf16 %v2016, %v2014
      %v2063 = vpack.c.bf16 %v2017, %v2015
      %v2064 = vpack.c.bf16 %v2020, %v2018
      %v2065 = vpack.c.bf16 %v2021, %v2019
      %v2066 = vpack.c.bf16 %v2024, %v2022
      %v2067 = vpack.c.bf16 %v2025, %v2023
      %v2068 = vpack.c.bf16 %v2028, %v2026
      %v2069 = vpack.c.bf16 %v2029, %v2027
      %v2070 = vpack.c.bf16 %v2032, %v2030
      %v2071 = vpack.c.bf16 %v2033, %v2031
      %v2072 = vpack.c.bf16 %v2036, %v2034
      %v2073 = vpack.c.bf16 %v2037, %v2035
      %v2074 = vpack.c.bf16 %v2040, %v2038
      %v2075 = vpack.c.bf16 %v2041, %v2039
      %v2076 = vpack.c.bf16 %v2044, %v2042
      %v2077 = vpack.c.bf16 %v2045, %v2043
      %v2078 = vld [vmem:[%s5] sm:$0xff]
      %v2079 = vld [vmem:[%s5 + $0x8] sm:$0xff]
      %v2080 = vld [vmem:[%s5 + $0x10] sm:$0xff]
      %v2081 = vld [vmem:[%s5 + $0x18] sm:$0xff]
      %v2082 = vld [vmem:[%s5 + $0x20] sm:$0xff]
      %v2083 = vld [vmem:[%s5 + $0x28] sm:$0xff]
      %v2084 = vld [vmem:[%s5 + $0x30] sm:$0xff]
      %v2085 = vld [vmem:[%s5 + $0x38] sm:$0xff]
      %v2086 = vld [vmem:[%s5 + $0x40] sm:$0xff]
      %v2087 = vld [vmem:[%s5 + $0x48] sm:$0xff]
      %v2088 = vld [vmem:[%s5 + $0x50] sm:$0xff]
      %v2089 = vld [vmem:[%s5 + $0x58] sm:$0xff]
      %v2090 = vld [vmem:[%s5 + $0x60] sm:$0xff]
      %v2091 = vld [vmem:[%s5 + $0x68] sm:$0xff]
      %v2092 = vld [vmem:[%s5 + $0x70] sm:$0xff]
      %v2093 = vld [vmem:[%s5 + $0x78] sm:$0xff]
      %v2094 = vld [vmem:[%s5 + $0x80] sm:$0xff]
      %v2095 = vld [vmem:[%s5 + $0x88] sm:$0xff]
      %v2096 = vld [vmem:[%s5 + $0x90] sm:$0xff]
      %v2097 = vld [vmem:[%s5 + $0x98] sm:$0xff]
      %v2098 = vld [vmem:[%s5 + $0xa0] sm:$0xff]
      %v2099 = vld [vmem:[%s5 + $0xa8] sm:$0xff]
      %v2100 = vld [vmem:[%s5 + $0xb0] sm:$0xff]
      %v2101 = vld [vmem:[%s5 + $0xb8] sm:$0xff]
      %v2102 = vld [vmem:[%s5 + $0xc0] sm:$0xff]
      %v2103 = vld [vmem:[%s5 + $0xc8] sm:$0xff]
      %v2104 = vld [vmem:[%s5 + $0xd0] sm:$0xff]
      %v2105 = vld [vmem:[%s5 + $0xd8] sm:$0xff]
      %v2106 = vld [vmem:[%s5 + $0xe0] sm:$0xff]
      %v2107 = vld [vmem:[%s5 + $0xe8] sm:$0xff]
      %v2108 = vld [vmem:[%s5 + $0xf0] sm:$0xff]
      %v2109 = vld [vmem:[%s5 + $0xf8] sm:$0xff]
      %v2110 = vld [vmem:[%s6] sm:$0x3]
      %v2112 = vlaneseq
      %v2113 = vshrl.u32 %v2112, 7
      %v2114 = vsub.s32 0, %v2113
      %v2115 = vrot.slane %v2110, %v2114
      %v2116 = vlaneseq
      %v2117 = vshrl.u32 %v2116, 7
      %v2118 = vsub.s32 1, %v2117
      %v2119 = vrot.slane %v2110, %v2118
      %v2154 = vunpack.c.l.b16 %v2078
      %v2155 = vunpack.c.h.b16 %v2078
      %v2156 = vunpack.c.l.b16 %v2079
      %v2157 = vunpack.c.h.b16 %v2079
      %v2158 = vunpack.c.l.b16 %v2080
      %v2159 = vunpack.c.h.b16 %v2080
      %v2160 = vunpack.c.l.b16 %v2081
      %v2161 = vunpack.c.h.b16 %v2081
      %v2162 = vunpack.c.l.b16 %v2082
      %v2163 = vunpack.c.h.b16 %v2082
      %v2164 = vunpack.c.l.b16 %v2083
      %v2165 = vunpack.c.h.b16 %v2083
      %v2166 = vunpack.c.l.b16 %v2084
      %v2167 = vunpack.c.h.b16 %v2084
      %v2168 = vunpack.c.l.b16 %v2085
      %v2169 = vunpack.c.h.b16 %v2085
      %v2170 = vunpack.c.l.b16 %v2086
      %v2171 = vunpack.c.h.b16 %v2086
      %v2172 = vunpack.c.l.b16 %v2087
      %v2173 = vunpack.c.h.b16 %v2087
      %v2174 = vunpack.c.l.b16 %v2088
      %v2175 = vunpack.c.h.b16 %v2088
      %v2176 = vunpack.c.l.b16 %v2089
      %v2177 = vunpack.c.h.b16 %v2089
      %v2178 = vunpack.c.l.b16 %v2090
      %v2179 = vunpack.c.h.b16 %v2090
      %v2180 = vunpack.c.l.b16 %v2091
      %v2181 = vunpack.c.h.b16 %v2091
      %v2182 = vunpack.c.l.b16 %v2092
      %v2183 = vunpack.c.h.b16 %v2092
      %v2184 = vunpack.c.l.b16 %v2093
      %v2185 = vunpack.c.h.b16 %v2093
      %v2186 = vunpack.c.l.b16 %v2094
      %v2187 = vunpack.c.h.b16 %v2094
      %v2188 = vunpack.c.l.b16 %v2095
      %v2189 = vunpack.c.h.b16 %v2095
      %v2190 = vunpack.c.l.b16 %v2096
      %v2191 = vunpack.c.h.b16 %v2096
      %v2192 = vunpack.c.l.b16 %v2097
      %v2193 = vunpack.c.h.b16 %v2097
      %v2194 = vunpack.c.l.b16 %v2098
      %v2195 = vunpack.c.h.b16 %v2098
      %v2196 = vunpack.c.l.b16 %v2099
      %v2197 = vunpack.c.h.b16 %v2099
      %v2198 = vunpack.c.l.b16 %v2100
      %v2199 = vunpack.c.h.b16 %v2100
      %v2200 = vunpack.c.l.b16 %v2101
      %v2201 = vunpack.c.h.b16 %v2101
      %v2202 = vunpack.c.l.b16 %v2102
      %v2203 = vunpack.c.h.b16 %v2102
      %v2204 = vunpack.c.l.b16 %v2103
      %v2205 = vunpack.c.h.b16 %v2103
      %v2206 = vunpack.c.l.b16 %v2104
      %v2207 = vunpack.c.h.b16 %v2104
      %v2208 = vunpack.c.l.b16 %v2105
      %v2209 = vunpack.c.h.b16 %v2105
      %v2210 = vunpack.c.l.b16 %v2106
      %v2211 = vunpack.c.h.b16 %v2106
      %v2212 = vunpack.c.l.b16 %v2107
      %v2213 = vunpack.c.h.b16 %v2107
      %v2214 = vunpack.c.l.b16 %v2108
      %v2215 = vunpack.c.h.b16 %v2108
      %v2216 = vunpack.c.l.b16 %v2109
      %v2217 = vunpack.c.h.b16 %v2109
      %v2218 = vpack.c.b16 %v2156, %v2154
      %v2219 = vpack.c.b16 %v2157, %v2155
      %v2220 = vpack.c.b16 %v2160, %v2158
      %v2221 = vpack.c.b16 %v2161, %v2159
      %v2222 = vpack.c.b16 %v2164, %v2162
      %v2223 = vpack.c.b16 %v2165, %v2163
      %v2224 = vpack.c.b16 %v2168, %v2166
      %v2225 = vpack.c.b16 %v2169, %v2167
      %v2226 = vpack.c.b16 %v2172, %v2170
      %v2227 = vpack.c.b16 %v2173, %v2171
      %v2228 = vpack.c.b16 %v2176, %v2174
      %v2229 = vpack.c.b16 %v2177, %v2175
      %v2230 = vpack.c.b16 %v2180, %v2178
      %v2231 = vpack.c.b16 %v2181, %v2179
      %v2232 = vpack.c.b16 %v2184, %v2182
      %v2233 = vpack.c.b16 %v2185, %v2183
      %v2234 = vpack.c.b16 %v2188, %v2186
      %v2235 = vpack.c.b16 %v2189, %v2187
      %v2236 = vpack.c.b16 %v2192, %v2190
      %v2237 = vpack.c.b16 %v2193, %v2191
      %v2238 = vpack.c.b16 %v2196, %v2194
      %v2239 = vpack.c.b16 %v2197, %v2195
      %v2240 = vpack.c.b16 %v2200, %v2198
      %v2241 = vpack.c.b16 %v2201, %v2199
      %v2242 = vpack.c.b16 %v2204, %v2202
      %v2243 = vpack.c.b16 %v2205, %v2203
      %v2244 = vpack.c.b16 %v2208, %v2206
      %v2245 = vpack.c.b16 %v2209, %v2207
      %v2246 = vpack.c.b16 %v2212, %v2210
      %v2247 = vpack.c.b16 %v2213, %v2211
      %v2248 = vpack.c.b16 %v2216, %v2214
      %v2249 = vpack.c.b16 %v2217, %v2215
      %2282 = vmatprep.subr.bf16.mxu0 %v2219
      %2283 = vmatpush1.bf16.msra.mxu0 %v2218
      %2284 = vmatprep.subr.bf16.mxu0 %v2221
      %2285 = vmatpush1.bf16.msra.mxu0 %v2220
      %2286 = vmatprep.subr.bf16.mxu0 %v2223
      %2287 = vmatpush1.bf16.msra.mxu0 %v2222
      %2288 = vmatprep.subr.bf16.mxu0 %v2225
      %2289 = vmatpush1.bf16.msra.mxu0 %v2224
      %2290 = vmatprep.subr.bf16.mxu0 %v2227
      %2291 = vmatpush1.bf16.msra.mxu0 %v2226
      %2292 = vmatprep.subr.bf16.mxu0 %v2229
      %2293 = vmatpush1.bf16.msra.mxu0 %v2228
      %2294 = vmatprep.subr.bf16.mxu0 %v2231
      %2295 = vmatpush1.bf16.msra.mxu0 %v2230
      %2296 = vmatprep.subr.bf16.mxu0 %v2233
      %2297 = vmatpush1.bf16.msra.mxu0 %v2232
      %2298 = vmatprep.subr.bf16.mxu0 %v2235
      %2299 = vmatpush1.bf16.msra.mxu0 %v2234
      %2300 = vmatprep.subr.bf16.mxu0 %v2237
      %2301 = vmatpush1.bf16.msra.mxu0 %v2236
      %2302 = vmatprep.subr.bf16.mxu0 %v2239
      %2303 = vmatpush1.bf16.msra.mxu0 %v2238
      %2304 = vmatprep.subr.bf16.mxu0 %v2241
      %2305 = vmatpush1.bf16.msra.mxu0 %v2240
      %2306 = vmatprep.subr.bf16.mxu0 %v2243
      %2307 = vmatpush1.bf16.msra.mxu0 %v2242
      %2308 = vmatprep.subr.bf16.mxu0 %v2245
      %2309 = vmatpush1.bf16.msra.mxu0 %v2244
      %2310 = vmatprep.subr.bf16.mxu0 %v2247
      %2311 = vmatpush1.bf16.msra.mxu0 %v2246
      %2312 = vmatprep.subr.bf16.mxu0 %v2249
      %2313 = vmatpush1.bf16.msra.mxu0 %v2248
      %2314 = vmatprep.mubr.bf16.mxu0 %v2047
      %2315 = vmatmul.mubr.bf16.gmra.mrb[0].mxu0 %v2046
      %v2316 = vpop.f32.mrb[0].mxu0
      %v2317 = vadd.f32 %v2115, %v2316
      %v2318 = vpop.f32.mrb[0].mxu0
      %v2319 = vadd.f32 %v2119, %v2318
      %v2320 = vpop.f32.mrb[0].mxu0
      %v2321 = vadd.f32 %v2115, %v2320
      %v2322 = vpop.f32.mrb[0].mxu0
      %v2323 = vadd.f32 %v2119, %v2322
      %2324 = vmatprep.mubr.bf16.mxu0 %v2049
      %2325 = vmatmul.mubr.bf16.gmra.mrb[0].mxu0 %v2048
      %v2326 = vpop.f32.mrb[0].mxu0
      %v2327 = vadd.f32 %v2115, %v2326
      %v2328 = vpop.f32.mrb[0].mxu0
      %v2329 = vadd.f32 %v2119, %v2328
      %v2330 = vpop.f32.mrb[0].mxu0
      %v2331 = vadd.f32 %v2115, %v2330
      %v2332 = vpop.f32.mrb[0].mxu0
      %v2333 = vadd.f32 %v2119, %v2332
      %2334 = vmatprep.mubr.bf16.mxu0 %v2051
      %2335 = vmatmul.mubr.bf16.gmra.mrb[0].mxu0 %v2050
      %v2336 = vpop.f32.mrb[0].mxu0
      %v2337 = vadd.f32 %v2115, %v2336
      %v2338 = vpop.f32.mrb[0].mxu0
      %v2339 = vadd.f32 %v2119, %v2338
      %v2340 = vpop.f32.mrb[0].mxu0
      %v2341 = vadd.f32 %v2115, %v2340
      %v2342 = vpop.f32.mrb[0].mxu0
      %v2343 = vadd.f32 %v2119, %v2342
      %2344 = vmatprep.mubr.bf16.mxu0 %v2053
      %2345 = vmatmul.mubr.bf16.gmra.mrb[0].mxu0 %v2052
      %v2346 = vpop.f32.mrb[0].mxu0
      %v2347 = vadd.f32 %v2115, %v2346
      %v2348 = vpop.f32.mrb[0].mxu0
      %v2349 = vadd.f32 %v2119, %v2348
      %v2350 = vpop.f32.mrb[0].mxu0
      %v2351 = vadd.f32 %v2115, %v2350
      %v2352 = vpop.f32.mrb[0].mxu0
      %v2353 = vadd.f32 %v2119, %v2352
      %2354 = vmatprep.mubr.bf16.mxu0 %v2055
      %2355 = vmatmul.mubr.bf16.gmra.mrb[0].mxu0 %v2054
      %v2356 = vpop.f32.mrb[0].mxu0
      %v2357 = vadd.f32 %v2115, %v2356
      %v2358 = vpop.f32.mrb[0].mxu0
      %v2359 = vadd.f32 %v2119, %v2358
      %v2360 = vpop.f32.mrb[0].mxu0
      %v2361 = vadd.f32 %v2115, %v2360
      %v2362 = vpop.f32.mrb[0].mxu0
      %v2363 = vadd.f32 %v2119, %v2362
      %2364 = vmatprep.mubr.bf16.mxu0 %v2057
      %2365 = vmatmul.mubr.bf16.gmra.mrb[0].mxu0 %v2056
      %v2366 = vpop.f32.mrb[0].mxu0
      %v2367 = vadd.f32 %v2115, %v2366
      %v2368 = vpop.f32.mrb[0].mxu0
      %v2369 = vadd.f32 %v2119, %v2368
      %v2370 = vpop.f32.mrb[0].mxu0
      %v2371 = vadd.f32 %v2115, %v2370
      %v2372 = vpop.f32.mrb[0].mxu0
      %v2373 = vadd.f32 %v2119, %v2372
      %2374 = vmatprep.mubr.bf16.mxu0 %v2059
      %2375 = vmatmul.mubr.bf16.gmra.mrb[0].mxu0 %v2058
      %v2376 = vpop.f32.mrb[0].mxu0
      %v2377 = vadd.f32 %v2115, %v2376
      %v2378 = vpop.f32.mrb[0].mxu0
      %v2379 = vadd.f32 %v2119, %v2378
      %v2380 = vpop.f32.mrb[0].mxu0
      %v2381 = vadd.f32 %v2115, %v2380
      %v2382 = vpop.f32.mrb[0].mxu0
      %v2383 = vadd.f32 %v2119, %v2382
      %2384 = vmatprep.mubr.bf16.mxu0 %v2061
      %2385 = vmatmul.mubr.bf16.gmra.mrb[0].mxu0 %v2060
      %v2386 = vpop.f32.mrb[0].mxu0
      %v2387 = vadd.f32 %v2115, %v2386
      %v2388 = vpop.f32.mrb[0].mxu0
      %v2389 = vadd.f32 %v2119, %v2388
      %v2390 = vpop.f32.mrb[0].mxu0
      %v2391 = vadd.f32 %v2115, %v2390
      %v2392 = vpop.f32.mrb[0].mxu0
      %v2393 = vadd.f32 %v2119, %v2392
      %2394 = vmatprep.mubr.bf16.mxu0 %v2063
      %2395 = vmatmul.mubr.bf16.gmra.mrb[0].mxu0 %v2062
      %v2396 = vpop.f32.mrb[0].mxu0
      %v2397 = vadd.f32 %v2115, %v2396
      %v2398 = vpop.f32.mrb[0].mxu0
      %v2399 = vadd.f32 %v2119, %v2398
      %v2400 = vpop.f32.mrb[0].mxu0
      %v2401 = vadd.f32 %v2115, %v2400
      %v2402 = vpop.f32.mrb[0].mxu0
      %v2403 = vadd.f32 %v2119, %v2402
      %2404 = vmatprep.mubr.bf16.mxu0 %v2065
      %2405 = vmatmul.mubr.bf16.gmra.mrb[0].mxu0 %v2064
      %v2406 = vpop.f32.mrb[0].mxu0
      %v2407 = vadd.f32 %v2115, %v2406
      %v2408 = vpop.f32.mrb[0].mxu0
      %v2409 = vadd.f32 %v2119, %v2408
      %v2410 = vpop.f32.mrb[0].mxu0
      %v2411 = vadd.f32 %v2115, %v2410
      %v2412 = vpop.f32.mrb[0].mxu0
      %v2413 = vadd.f32 %v2119, %v2412
      %2414 = vmatprep.mubr.bf16.mxu0 %v2067
      %2415 = vmatmul.mubr.bf16.gmra.mrb[0].mxu0 %v2066
      %v2416 = vpop.f32.mrb[0].mxu0
      %v2417 = vadd.f32 %v2115, %v2416
      %v2418 = vpop.f32.mrb[0].mxu0
      %v2419 = vadd.f32 %v2119, %v2418
      %v2420 = vpop.f32.mrb[0].mxu0
      %v2421 = vadd.f32 %v2115, %v2420
      %v2422 = vpop.f32.mrb[0].mxu0
      %v2423 = vadd.f32 %v2119, %v2422
      %2424 = vmatprep.mubr.bf16.mxu0 %v2069
      %2425 = vmatmul.mubr.bf16.gmra.mrb[0].mxu0 %v2068
      %v2426 = vpop.f32.mrb[0].mxu0
      %v2427 = vadd.f32 %v2115, %v2426
      %v2428 = vpop.f32.mrb[0].mxu0
      %v2429 = vadd.f32 %v2119, %v2428
      %v2430 = vpop.f32.mrb[0].mxu0
      %v2431 = vadd.f32 %v2115, %v2430
      %v2432 = vpop.f32.mrb[0].mxu0
      %v2433 = vadd.f32 %v2119, %v2432
      %2434 = vmatprep.mubr.bf16.mxu0 %v2071
      %2435 = vmatmul.mubr.bf16.gmra.mrb[0].mxu0 %v2070
      %v2436 = vpop.f32.mrb[0].mxu0
      %v2437 = vadd.f32 %v2115, %v2436
      %v2438 = vpop.f32.mrb[0].mxu0
      %v2439 = vadd.f32 %v2119, %v2438
      %v2440 = vpop.f32.mrb[0].mxu0
      %v2441 = vadd.f32 %v2115, %v2440
      %v2442 = vpop.f32.mrb[0].mxu0
      %v2443 = vadd.f32 %v2119, %v2442
      %2444 = vmatprep.mubr.bf16.mxu0 %v2073
      %2445 = vmatmul.mubr.bf16.gmra.mrb[0].mxu0 %v2072
      %v2446 = vpop.f32.mrb[0].mxu0
      %v2447 = vadd.f32 %v2115, %v2446
      %v2448 = vpop.f32.mrb[0].mxu0
      %v2449 = vadd.f32 %v2119, %v2448
      %v2450 = vpop.f32.mrb[0].mxu0
      %v2451 = vadd.f32 %v2115, %v2450
      %v2452 = vpop.f32.mrb[0].mxu0
      %v2453 = vadd.f32 %v2119, %v2452
      %2454 = vmatprep.mubr.bf16.mxu0 %v2075
      %2455 = vmatmul.mubr.bf16.gmra.mrb[0].mxu0 %v2074
      %v2456 = vpop.f32.mrb[0].mxu0
      %v2457 = vadd.f32 %v2115, %v2456
      %v2458 = vpop.f32.mrb[0].mxu0
      %v2459 = vadd.f32 %v2119, %v2458
      %v2460 = vpop.f32.mrb[0].mxu0
      %v2461 = vadd.f32 %v2115, %v2460
      %v2462 = vpop.f32.mrb[0].mxu0
      %v2463 = vadd.f32 %v2119, %v2462
      %2464 = vmatprep.mubr.bf16.mxu0 %v2077
      %2465 = vmatmul.mubr.bf16.gmra.mrb[0].mxu0 %v2076
      %v2466 = vpop.f32.mrb[0].mxu0
      %v2467 = vadd.f32 %v2115, %v2466
      %v2468 = vpop.f32.mrb[0].mxu0
      %v2469 = vadd.f32 %v2119, %v2468
      %v2470 = vpop.f32.mrb[0].mxu0
      %v2471 = vadd.f32 %v2115, %v2470
      %v2472 = vpop.f32.mrb[0].mxu0
      %v2473 = vadd.f32 %v2119, %v2472
      %2474 = vdwg.mxu0
      %v2475 = vmul.f32 %v2317, 0.01
      %v2476 = vmul.f32 %v2319, 0.01
      %v2477 = vmul.f32 %v2321, 0.01
      %v2478 = vmul.f32 %v2323, 0.01
      %v2479 = vmul.f32 %v2327, 0.01
      %v2480 = vmul.f32 %v2329, 0.01
      %v2481 = vmul.f32 %v2331, 0.01
      %v2482 = vmul.f32 %v2333, 0.01
      %v2483 = vmul.f32 %v2337, 0.01
      %v2484 = vmul.f32 %v2339, 0.01
      %v2485 = vmul.f32 %v2341, 0.01
      %v2486 = vmul.f32 %v2343, 0.01
      %v2487 = vmul.f32 %v2347, 0.01
      %v2488 = vmul.f32 %v2349, 0.01
      %v2489 = vmul.f32 %v2351, 0.01
      %v2490 = vmul.f32 %v2353, 0.01
      %v2491 = vmul.f32 %v2357, 0.01
      %v2492 = vmul.f32 %v2359, 0.01
      %v2493 = vmul.f32 %v2361, 0.01
      %v2494 = vmul.f32 %v2363, 0.01
      %v2495 = vmul.f32 %v2367, 0.01
      %v2496 = vmul.f32 %v2369, 0.01
      %v2497 = vmul.f32 %v2371, 0.01
      %v2498 = vmul.f32 %v2373, 0.01
      %v2499 = vmul.f32 %v2377, 0.01
      %v2500 = vmul.f32 %v2379, 0.01
      %v2501 = vmul.f32 %v2381, 0.01
      %v2502 = vmul.f32 %v2383, 0.01
      %v2503 = vmul.f32 %v2387, 0.01
      %v2504 = vmul.f32 %v2389, 0.01
      %v2505 = vmul.f32 %v2391, 0.01
      %v2506 = vmul.f32 %v2393, 0.01
      %v2507 = vmul.f32 %v2397, 0.01
      %v2508 = vmul.f32 %v2399, 0.01
      %v2509 = vmul.f32 %v2401, 0.01
      %v2510 = vmul.f32 %v2403, 0.01
      %v2511 = vmul.f32 %v2407, 0.01
      %v2512 = vmul.f32 %v2409, 0.01
      %v2513 = vmul.f32 %v2411, 0.01
      %v2514 = vmul.f32 %v2413, 0.01
      %v2515 = vmul.f32 %v2417, 0.01
      %v2516 = vmul.f32 %v2419, 0.01
      %v2517 = vmul.f32 %v2421, 0.01
      %v2518 = vmul.f32 %v2423, 0.01
      %v2519 = vmul.f32 %v2427, 0.01
      %v2520 = vmul.f32 %v2429, 0.01
      %v2521 = vmul.f32 %v2431, 0.01
      %v2522 = vmul.f32 %v2433, 0.01
      %v2523 = vmul.f32 %v2437, 0.01
      %v2524 = vmul.f32 %v2439, 0.01
      %v2525 = vmul.f32 %v2441, 0.01
      %v2526 = vmul.f32 %v2443, 0.01
      %v2527 = vmul.f32 %v2447, 0.01
      %v2528 = vmul.f32 %v2449, 0.01
      %v2529 = vmul.f32 %v2451, 0.01
      %v2530 = vmul.f32 %v2453, 0.01
      %v2531 = vmul.f32 %v2457, 0.01
      %v2532 = vmul.f32 %v2459, 0.01
      %v2533 = vmul.f32 %v2461, 0.01
      %v2534 = vmul.f32 %v2463, 0.01
      %v2535 = vmul.f32 %v2467, 0.01
      %v2536 = vmul.f32 %v2469, 0.01
      %v2537 = vmul.f32 %v2471, 0.01
      %v2538 = vmul.f32 %v2473, 0.01
      %v2539 = vmax.f32 %v2317, %v2475
      %v2540 = vmax.f32 %v2319, %v2476
      %v2541 = vmax.f32 %v2321, %v2477
      %v2542 = vmax.f32 %v2323, %v2478
      %v2543 = vmax.f32 %v2327, %v2479
      %v2544 = vmax.f32 %v2329, %v2480
      %v2545 = vmax.f32 %v2331, %v2481
      %v2546 = vmax.f32 %v2333, %v2482
      %v2547 = vmax.f32 %v2337, %v2483
      %v2548 = vmax.f32 %v2339, %v2484
      %v2549 = vmax.f32 %v2341, %v2485
      %v2550 = vmax.f32 %v2343, %v2486
      %v2551 = vmax.f32 %v2347, %v2487
      %v2552 = vmax.f32 %v2349, %v2488
      %v2553 = vmax.f32 %v2351, %v2489
      %v2554 = vmax.f32 %v2353, %v2490
      %v2555 = vmax.f32 %v2357, %v2491
      %v2556 = vmax.f32 %v2359, %v2492
      %v2557 = vmax.f32 %v2361, %v2493
      %v2558 = vmax.f32 %v2363, %v2494
      %v2559 = vmax.f32 %v2367, %v2495
      %v2560 = vmax.f32 %v2369, %v2496
      %v2561 = vmax.f32 %v2371, %v2497
      %v2562 = vmax.f32 %v2373, %v2498
      %v2563 = vmax.f32 %v2377, %v2499
      %v2564 = vmax.f32 %v2379, %v2500
      %v2565 = vmax.f32 %v2381, %v2501
      %v2566 = vmax.f32 %v2383, %v2502
      %v2567 = vmax.f32 %v2387, %v2503
      %v2568 = vmax.f32 %v2389, %v2504
      %v2569 = vmax.f32 %v2391, %v2505
      %v2570 = vmax.f32 %v2393, %v2506
      %v2571 = vmax.f32 %v2397, %v2507
      %v2572 = vmax.f32 %v2399, %v2508
      %v2573 = vmax.f32 %v2401, %v2509
      %v2574 = vmax.f32 %v2403, %v2510
      %v2575 = vmax.f32 %v2407, %v2511
      %v2576 = vmax.f32 %v2409, %v2512
      %v2577 = vmax.f32 %v2411, %v2513
      %v2578 = vmax.f32 %v2413, %v2514
      %v2579 = vmax.f32 %v2417, %v2515
      %v2580 = vmax.f32 %v2419, %v2516
      %v2581 = vmax.f32 %v2421, %v2517
      %v2582 = vmax.f32 %v2423, %v2518
      %v2583 = vmax.f32 %v2427, %v2519
      %v2584 = vmax.f32 %v2429, %v2520
      %v2585 = vmax.f32 %v2431, %v2521
      %v2586 = vmax.f32 %v2433, %v2522
      %v2587 = vmax.f32 %v2437, %v2523
      %v2588 = vmax.f32 %v2439, %v2524
      %v2589 = vmax.f32 %v2441, %v2525
      %v2590 = vmax.f32 %v2443, %v2526
      %v2591 = vmax.f32 %v2447, %v2527
      %v2592 = vmax.f32 %v2449, %v2528
      %v2593 = vmax.f32 %v2451, %v2529
      %v2594 = vmax.f32 %v2453, %v2530
      %v2595 = vmax.f32 %v2457, %v2531
      %v2596 = vmax.f32 %v2459, %v2532
      %v2597 = vmax.f32 %v2461, %v2533
      %v2598 = vmax.f32 %v2463, %v2534
      %v2599 = vmax.f32 %v2467, %v2535
      %v2600 = vmax.f32 %v2469, %v2536
      %v2601 = vmax.f32 %v2471, %v2537
      %v2602 = vmax.f32 %v2473, %v2538
      %v2603 = vld [vmem:[%s7] sm:$0x3]
      %v2605 = vlaneseq
      %v2606 = vshrl.u32 %v2605, 7
      %v2607 = vsub.s32 0, %v2606
      %v2608 = vrot.slane %v2603, %v2607
      %v2609 = vlaneseq
      %v2610 = vshrl.u32 %v2609, 7
      %v2611 = vsub.s32 1, %v2610
      %v2612 = vrot.slane %v2603, %v2611
      %v2615 = vmul.f32 %v2539, %v2608
      %v2616 = vmul.f32 %v2540, %v2612
      %v2617 = vmul.f32 %v2541, %v2608
      %v2618 = vmul.f32 %v2542, %v2612
      %v2619 = vmul.f32 %v2543, %v2608
      %v2620 = vmul.f32 %v2544, %v2612
      %v2621 = vmul.f32 %v2545, %v2608
      %v2622 = vmul.f32 %v2546, %v2612
      %v2623 = vmul.f32 %v2547, %v2608
      %v2624 = vmul.f32 %v2548, %v2612
      %v2625 = vmul.f32 %v2549, %v2608
      %v2626 = vmul.f32 %v2550, %v2612
      %v2627 = vmul.f32 %v2551, %v2608
      %v2628 = vmul.f32 %v2552, %v2612
      %v2629 = vmul.f32 %v2553, %v2608
      %v2630 = vmul.f32 %v2554, %v2612
      %v2631 = vmul.f32 %v2555, %v2608
      %v2632 = vmul.f32 %v2556, %v2612
      %v2633 = vmul.f32 %v2557, %v2608
      %v2634 = vmul.f32 %v2558, %v2612
      %v2635 = vmul.f32 %v2559, %v2608
      %v2636 = vmul.f32 %v2560, %v2612
      %v2637 = vmul.f32 %v2561, %v2608
      %v2638 = vmul.f32 %v2562, %v2612
      %v2639 = vmul.f32 %v2563, %v2608
      %v2640 = vmul.f32 %v2564, %v2612
      %v2641 = vmul.f32 %v2565, %v2608
      %v2642 = vmul.f32 %v2566, %v2612
      %v2643 = vmul.f32 %v2567, %v2608
      %v2644 = vmul.f32 %v2568, %v2612
      %v2645 = vmul.f32 %v2569, %v2608
      %v2646 = vmul.f32 %v2570, %v2612
      %v2647 = vmul.f32 %v2571, %v2608
      %v2648 = vmul.f32 %v2572, %v2612
      %v2649 = vmul.f32 %v2573, %v2608
      %v2650 = vmul.f32 %v2574, %v2612
      %v2651 = vmul.f32 %v2575, %v2608
      %v2652 = vmul.f32 %v2576, %v2612
      %v2653 = vmul.f32 %v2577, %v2608
      %v2654 = vmul.f32 %v2578, %v2612
      %v2655 = vmul.f32 %v2579, %v2608
      %v2656 = vmul.f32 %v2580, %v2612
      %v2657 = vmul.f32 %v2581, %v2608
      %v2658 = vmul.f32 %v2582, %v2612
      %v2659 = vmul.f32 %v2583, %v2608
      %v2660 = vmul.f32 %v2584, %v2612
      %v2661 = vmul.f32 %v2585, %v2608
      %v2662 = vmul.f32 %v2586, %v2612
      %v2663 = vmul.f32 %v2587, %v2608
      %v2664 = vmul.f32 %v2588, %v2612
      %v2665 = vmul.f32 %v2589, %v2608
      %v2666 = vmul.f32 %v2590, %v2612
      %v2667 = vmul.f32 %v2591, %v2608
      %v2668 = vmul.f32 %v2592, %v2612
      %v2669 = vmul.f32 %v2593, %v2608
      %v2670 = vmul.f32 %v2594, %v2612
      %v2671 = vmul.f32 %v2595, %v2608
      %v2672 = vmul.f32 %v2596, %v2612
      %v2673 = vmul.f32 %v2597, %v2608
      %v2674 = vmul.f32 %v2598, %v2612
      %v2675 = vmul.f32 %v2599, %v2608
      %v2676 = vmul.f32 %v2600, %v2612
      %v2677 = vmul.f32 %v2601, %v2608
      %v2678 = vmul.f32 %v2602, %v2612
      %v2679 = vadd.f32 %v2615, %v2616
      %2680 = vadd.xlane.f32.xlu0 %v2679
      %v2681 = vpop.xlane.xlu0 %2680
      %v2682 = vadd.f32 %v2617, %v2618
      %2683 = vadd.xlane.f32.xlu0 %v2682
      %v2684 = vpop.xlane.xlu0 %2683
      %v2685 = vadd.f32 %v2619, %v2620
      %2686 = vadd.xlane.f32.xlu0 %v2685
      %v2687 = vpop.xlane.xlu0 %2686
      %v2688 = vadd.f32 %v2621, %v2622
      %2689 = vadd.xlane.f32.xlu0 %v2688
      %v2690 = vpop.xlane.xlu0 %2689
      %v2691 = vadd.f32 %v2623, %v2624
      %2692 = vadd.xlane.f32.xlu0 %v2691
      %v2693 = vpop.xlane.xlu0 %2692
      %v2694 = vadd.f32 %v2625, %v2626
      %2695 = vadd.xlane.f32.xlu0 %v2694
      %v2696 = vpop.xlane.xlu0 %2695
      %v2697 = vadd.f32 %v2627, %v2628
      %2698 = vadd.xlane.f32.xlu0 %v2697
      %v2699 = vpop.xlane.xlu0 %2698
      %v2700 = vadd.f32 %v2629, %v2630
      %2701 = vadd.xlane.f32.xlu0 %v2700
      %v2702 = vpop.xlane.xlu0 %2701
      %v2703 = vadd.f32 %v2631, %v2632
      %2704 = vadd.xlane.f32.xlu0 %v2703
      %v2705 = vpop.xlane.xlu0 %2704
      %v2706 = vadd.f32 %v2633, %v2634
      %2707 = vadd.xlane.f32.xlu0 %v2706
      %v2708 = vpop.xlane.xlu0 %2707
      %v2709 = vadd.f32 %v2635, %v2636
      %2710 = vadd.xlane.f32.xlu0 %v2709
      %v2711 = vpop.xlane.xlu0 %2710
      %v2712 = vadd.f32 %v2637, %v2638
      %2713 = vadd.xlane.f32.xlu0 %v2712
      %v2714 = vpop.xlane.xlu0 %2713
      %v2715 = vadd.f32 %v2639, %v2640
      %2716 = vadd.xlane.f32.xlu0 %v2715
      %v2717 = vpop.xlane.xlu0 %2716
      %v2718 = vadd.f32 %v2641, %v2642
      %2719 = vadd.xlane.f32.xlu0 %v2718
      %v2720 = vpop.xlane.xlu0 %2719
      %v2721 = vadd.f32 %v2643, %v2644
      %2722 = vadd.xlane.f32.xlu0 %v2721
      %v2723 = vpop.xlane.xlu0 %2722
      %v2724 = vadd.f32 %v2645, %v2646
      %2725 = vadd.xlane.f32.xlu0 %v2724
      %v2726 = vpop.xlane.xlu0 %2725
      %v2727 = vadd.f32 %v2647, %v2648
      %2728 = vadd.xlane.f32.xlu0 %v2727
      %v2729 = vpop.xlane.xlu0 %2728
      %v2730 = vadd.f32 %v2649, %v2650
      %2731 = vadd.xlane.f32.xlu0 %v2730
      %v2732 = vpop.xlane.xlu0 %2731
      %v2733 = vadd.f32 %v2651, %v2652
      %2734 = vadd.xlane.f32.xlu0 %v2733
      %v2735 = vpop.xlane.xlu0 %2734
      %v2736 = vadd.f32 %v2653, %v2654
      %2737 = vadd.xlane.f32.xlu0 %v2736
      %v2738 = vpop.xlane.xlu0 %2737
      %v2739 = vadd.f32 %v2655, %v2656
      %2740 = vadd.xlane.f32.xlu0 %v2739
      %v2741 = vpop.xlane.xlu0 %2740
      %v2742 = vadd.f32 %v2657, %v2658
      %2743 = vadd.xlane.f32.xlu0 %v2742
      %v2744 = vpop.xlane.xlu0 %2743
      %v2745 = vadd.f32 %v2659, %v2660
      %2746 = vadd.xlane.f32.xlu0 %v2745
      %v2747 = vpop.xlane.xlu0 %2746
      %v2748 = vadd.f32 %v2661, %v2662
      %2749 = vadd.xlane.f32.xlu0 %v2748
      %v2750 = vpop.xlane.xlu0 %2749
      %v2751 = vadd.f32 %v2663, %v2664
      %2752 = vadd.xlane.f32.xlu0 %v2751
      %v2753 = vpop.xlane.xlu0 %2752
      %v2754 = vadd.f32 %v2665, %v2666
      %2755 = vadd.xlane.f32.xlu0 %v2754
      %v2756 = vpop.xlane.xlu0 %2755
      %v2757 = vadd.f32 %v2667, %v2668
      %2758 = vadd.xlane.f32.xlu0 %v2757
      %v2759 = vpop.xlane.xlu0 %2758
      %v2760 = vadd.f32 %v2669, %v2670
      %2761 = vadd.xlane.f32.xlu0 %v2760
      %v2762 = vpop.xlane.xlu0 %2761
      %v2763 = vadd.f32 %v2671, %v2672
      %2764 = vadd.xlane.f32.xlu0 %v2763
      %v2765 = vpop.xlane.xlu0 %2764
      %v2766 = vadd.f32 %v2673, %v2674
      %2767 = vadd.xlane.f32.xlu0 %v2766
      %v2768 = vpop.xlane.xlu0 %2767
      %v2769 = vadd.f32 %v2675, %v2676
      %2770 = vadd.xlane.f32.xlu0 %v2769
      %v2771 = vpop.xlane.xlu0 %2770
      %v2772 = vadd.f32 %v2677, %v2678
      %2773 = vadd.xlane.f32.xlu0 %v2772
      %v2774 = vpop.xlane.xlu0 %2773
      %v2775 = vld [vmem:[#allocation2] sm:$0x1]
      %v2777 = vlaneseq
      %v2778 = vshrl.u32 %v2777, 7
      %v2779 = vsub.s32 0, %v2778
      %v2780 = vrot.slane %v2775, %v2779
      %v2782 = vadd.f32 %v2681, %v2780
      %v2783 = vadd.f32 %v2684, %v2780
      %v2784 = vadd.f32 %v2687, %v2780
      %v2785 = vadd.f32 %v2690, %v2780
      %v2786 = vadd.f32 %v2693, %v2780
      %v2787 = vadd.f32 %v2696, %v2780
      %v2788 = vadd.f32 %v2699, %v2780
      %v2789 = vadd.f32 %v2702, %v2780
      %v2790 = vadd.f32 %v2705, %v2780
      %v2791 = vadd.f32 %v2708, %v2780
      %v2792 = vadd.f32 %v2711, %v2780
      %v2793 = vadd.f32 %v2714, %v2780
      %v2794 = vadd.f32 %v2717, %v2780
      %v2795 = vadd.f32 %v2720, %v2780
      %v2796 = vadd.f32 %v2723, %v2780
      %v2797 = vadd.f32 %v2726, %v2780
      %v2798 = vadd.f32 %v2729, %v2780
      %v2799 = vadd.f32 %v2732, %v2780
      %v2800 = vadd.f32 %v2735, %v2780
      %v2801 = vadd.f32 %v2738, %v2780
      %v2802 = vadd.f32 %v2741, %v2780
      %v2803 = vadd.f32 %v2744, %v2780
      %v2804 = vadd.f32 %v2747, %v2780
      %v2805 = vadd.f32 %v2750, %v2780
      %v2806 = vadd.f32 %v2753, %v2780
      %v2807 = vadd.f32 %v2756, %v2780
      %v2808 = vadd.f32 %v2759, %v2780
      %v2809 = vadd.f32 %v2762, %v2780
      %v2810 = vadd.f32 %v2765, %v2780
      %v2811 = vadd.f32 %v2768, %v2780
      %v2812 = vadd.f32 %v2771, %v2780
      %v2813 = vadd.f32 %v2774, %v2780
      %vm2814 = vcmask 7168
      %2815 = vst.msk [vmem:[%s336] sm:$0xff] %vm2814, %v2782
      %2816 = vst.msk [vmem:[%s336 + $0x8] sm:$0xff] %vm2814, %v2783
      %2817 = vst.msk [vmem:[%s336 + $0x10] sm:$0xff] %vm2814, %v2784
      %2818 = vst.msk [vmem:[%s336 + $0x18] sm:$0xff] %vm2814, %v2785
      %2819 = vst.msk [vmem:[%s336 + $0x20] sm:$0xff] %vm2814, %v2786
      %2820 = vst.msk [vmem:[%s336 + $0x28] sm:$0xff] %vm2814, %v2787
      %2821 = vst.msk [vmem:[%s336 + $0x30] sm:$0xff] %vm2814, %v2788
      %2822 = vst.msk [vmem:[%s336 + $0x38] sm:$0xff] %vm2814, %v2789
      %2823 = vst.msk [vmem:[%s336 + $0x40] sm:$0xff] %vm2814, %v2790
      %2824 = vst.msk [vmem:[%s336 + $0x48] sm:$0xff] %vm2814, %v2791
      %2825 = vst.msk [vmem:[%s336 + $0x50] sm:$0xff] %vm2814, %v2792
      %2826 = vst.msk [vmem:[%s336 + $0x58] sm:$0xff] %vm2814, %v2793
      %2827 = vst.msk [vmem:[%s336 + $0x60] sm:$0xff] %vm2814, %v2794
      %2828 = vst.msk [vmem:[%s336 + $0x68] sm:$0xff] %vm2814, %v2795
      %2829 = vst.msk [vmem:[%s336 + $0x70] sm:$0xff] %vm2814, %v2796
      %2830 = vst.msk [vmem:[%s336 + $0x78] sm:$0xff] %vm2814, %v2797
      %2831 = vst.msk [vmem:[%s336 + $0x80] sm:$0xff] %vm2814, %v2798
      %2832 = vst.msk [vmem:[%s336 + $0x88] sm:$0xff] %vm2814, %v2799
      %2833 = vst.msk [vmem:[%s336 + $0x90] sm:$0xff] %vm2814, %v2800
      %2834 = vst.msk [vmem:[%s336 + $0x98] sm:$0xff] %vm2814, %v2801
      %2835 = vst.msk [vmem:[%s336 + $0xa0] sm:$0xff] %vm2814, %v2802
      %2836 = vst.msk [vmem:[%s336 + $0xa8] sm:$0xff] %vm2814, %v2803
      %2837 = vst.msk [vmem:[%s336 + $0xb0] sm:$0xff] %vm2814, %v2804
      %2838 = vst.msk [vmem:[%s336 + $0xb8] sm:$0xff] %vm2814, %v2805
      %2839 = vst.msk [vmem:[%s336 + $0xc0] sm:$0xff] %vm2814, %v2806
      %2840 = vst.msk [vmem:[%s336 + $0xc8] sm:$0xff] %vm2814, %v2807
      %2841 = vst.msk [vmem:[%s336 + $0xd0] sm:$0xff] %vm2814, %v2808
      %2842 = vst.msk [vmem:[%s336 + $0xd8] sm:$0xff] %vm2814, %v2809
      %2843 = vst.msk [vmem:[%s336 + $0xe0] sm:$0xff] %vm2814, %v2810
      %2844 = vst.msk [vmem:[%s336 + $0xe8] sm:$0xff] %vm2814, %v2811
      %2845 = vst.msk [vmem:[%s336 + $0xf0] sm:$0xff] %vm2814, %v2812
      %2846 = vst.msk [vmem:[%s336 + $0xf8] sm:$0xff] %vm2814, %v2813
      %s2847 = smul.u32 32, %s22
      %p2848 = scmp.lt.s32.totalorder %s2847, 63
      %s2849 = scalar_select %p2848, %s2847, 63
      %s2850 = smul.addr %s2849, 8
      %s2851 = scalar_lea.vmem %s9, %s2850
      // Predicated region
      $region57: #{dqfd_forward.1} parent=55 // pred_check
        %p2852 = pneg %p234
      $region58: #{dqfd_forward.1} parent=55 // pred_check_branch
        %2854 = sbr.rel (%p2852) target = $region60
      $region59: #{dqfd_forward.1} parent=55 // pred_region
        %s2855 = smul.u32 32, %s22
      $region60: #{dqfd_forward.1} parent=55 // pred_fallthru
        _
    $region56: #{dqfd_forward.1} parent=5 // pred_fallthru
      _
    %p2856 = scmp.le.s32.totalorder 2, %s17
    // Predicated region
    $region61: #{dqfd_forward.1} parent=5 // pred_check
      %p2857 = pneg %p2856
    $region62: #{dqfd_forward.1} parent=5 // pred_check_branch
      %2859 = sbr.rel (%p2857) target = $region64
    $region63: #{dqfd_forward.1} parent=5 // pred_region
      %s2860 = ssub.s32 %s17, 2
      // Predicated region
      $region65: #{dqfd_forward.1} parent=63 // pred_check
        %p2861 = pneg %p240
      $region66: #{dqfd_forward.1} parent=63 // pred_check_branch
        %2863 = sbr.rel (%p2861) target = $region68
      $region67: #{dqfd_forward.1} parent=63 // pred_region
        %s2864 = smul.u32 32, %s23
        %p2865 = scmp.lt.s32.totalorder %s2864, 63
        %s2866 = scalar_select %p2865, %s2864, 63
        %s2867 = smul.addr %s2866, 8
        %s2868 = scalar_lea.vmem %s9, %s2867
      $region68: #{dqfd_forward.1} parent=63 // pred_fallthru
        _
    $region64: #{dqfd_forward.1} parent=5 // pred_fallthru
      _
  $region6: #{dqfd_forward.1} parent=0 // loop_footer
    %s21 = sadd.s32 1, %s17
  $region7: #{dqfd_forward.1} parent=0 // loop_footer_branch
    %16 = sbr.rel target = $region3
  $region8: #{dqfd_forward.1} parent=0 // loop_exit
    _

</llo_original>
